<compile_context>
chip_gen: v5e
topology: v5e:2x2
jax: 0.10.0
libtpu: 0.0.40
codegen_flags: <defaults>
</compile_context>

<pallas_src>
import numpy as np

import jax
import jax.numpy as jnp
from jax import lax
from jax.experimental import pallas as pl
from jax.experimental.pallas import tpu as pltpu

EPS = 1e-5


def _device_vmem_bytes():
    # Device-derived VMEM capacity (v5e/v6e: 128 MiB, v7x: 64 MiB per core).
    try:
        return int(pltpu.get_tpu_info().vmem_capacity_bytes)
    except Exception:
        return 64 << 20  # conservative fallback: covers every generation


def _pick_batch_block(num_batches, bytes_per_elem, budget):
    """Largest per-step batch block that (a) divides N, (b) keeps >= 2 grid
    steps when N >= 2 (so both v7x TensorCores get work), (c) fits VMEM."""
    best = 1
    for nb in range(1, min(num_batches, 8) + 1):
        if num_batches % nb:
            continue
        if num_batches >= 2 and num_batches // nb < 2:
            continue
        if nb * bytes_per_elem > budget:
            continue
        best = nb
    return best


def _instance_norm(h, inv_s):
    # h: (C, S) float32. Per-channel normalization over the spatial (lane)
    # axis, biased variance, eps=1e-5 (nn.InstanceNorm3d defaults, affine=False).
    # Kept in f32 on purpose (v5e has no bf16 VPU/EUP).
    mean = jnp.sum(h, axis=-1, keepdims=True) * inv_s
    hc = h - mean
    var = jnp.sum(hc * hc, axis=-1, keepdims=True) * inv_s
    return hc * lax.rsqrt(var + EPS)


def _bottleneck_kernel(x_ref, w1_ref, w2_ref, w3_ref, o_ref):
    # x_ref : (Nb, Cin, S)    spatial-last block, Nb batch elements
    # w1_ref: (planes, Cin)   1x1x1 conv weights as (Cout, Cin) matrices
    # w2_ref: (planes, planes)
    # w3_ref: (4*planes, planes)
    # o_ref : (Nb, 4*planes, S)
    nb = x_ref.shape[0]
    inv_s = jnp.float32(1.0 / x_ref.shape[-1])

    # Hoist weight loads out of the per-batch loop.
    w1 = w1_ref[...]
    w2 = w2_ref[...]
    w3 = w3_ref[...]
    dims = (((1,), (0,)), ((), ()))

    def body(n, carry):
        x = x_ref[n]                                      # (Cin, S), native dtype

        # conv1 -> IN -> ReLU : (planes, Cin) @ (Cin, S) -> (planes, S)
        h = lax.dot_general(w1, x, dims, preferred_element_type=jnp.float32)
        h = jnp.maximum(_instance_norm(h, inv_s), 0.0)

        # conv2 -> IN -> ReLU. Operands take w2's dtype (bf16 on the MXU when
        # the wrapper enables it); accumulation stays f32.
        h = lax.dot_general(w2, h.astype(w2.dtype), dims,
                            preferred_element_type=jnp.float32)
        h = jnp.maximum(_instance_norm(h, inv_s), 0.0)

        # conv3 -> IN
        h = lax.dot_general(w3, h.astype(w3.dtype), dims,
                            preferred_element_type=jnp.float32)
        h = _instance_norm(h, inv_s)

        # Identity residual (inplanes == 4*planes) + ReLU.
        out = jnp.maximum(h + x.astype(jnp.float32), 0.0)
        o_ref[n] = out.astype(o_ref.dtype)
        return carry

    lax.fori_loop(0, nb, body, 0, unroll=True)


def bottleneck_forward(x_ncdhw, w1, w2, w3, *, use_bf16_mxu=None, batch_block=None):
    """Bottleneck forward (kernel_size=1, stride=1, no downsample).

    x_ncdhw: (N, Cin, D, H, W); w1 (planes, Cin), w2 (planes, planes),
    w3 (4*planes, planes). Returns (N, 4*planes, D, H, W) in x's dtype.
    """
    N, Cin, D, H, W = x_ncdhw.shape
    planes = w1.shape[0]
    Cout = w3.shape[0]
    assert w1.shape == (planes, Cin)
    assert w2.shape == (planes, planes)
    assert w3.shape == (Cout, planes)
    assert Cout == Cin, "identity residual requires inplanes == 4*planes"
    S = D * H * W

    if use_bf16_mxu is None:
        use_bf16_mxu = (planes >= 64) or (x_ncdhw.dtype == jnp.bfloat16)

    # Spatial-last (C, S): plain reshape, no transpose, no pad, no output slice.
    x_ncs = x_ncdhw.reshape(N, Cin, S)

    # Weight dtype handling hoisted out of the grid body.
    w1 = w1.astype(x_ncdhw.dtype)                       # conv1 matches input dtype
    mxu_dtype = jnp.bfloat16 if use_bf16_mxu else jnp.float32
    w2 = w2.astype(mxu_dtype)
    w3 = w3.astype(mxu_dtype)

    # --- VMEM budgeting (device-derived cap; v7x has only 64 MiB). ---
    vmem_cap = int(0.9 * _device_vmem_bytes())
    in_item = np.dtype(x_ncdhw.dtype).itemsize
    out_item = in_item
    # Per batch element: double-buffered I/O blocks + f32 intermediates.
    per_elem = 2 * S * (Cin * in_item + Cout * out_item) + S * (2 * planes + 2 * Cout) * 4
    w_bytes = sum(int(a.size) * np.dtype(a.dtype).itemsize for a in (w1, w2, w3))

    if batch_block is None:
        batch_block = _pick_batch_block(N, per_elem, vmem_cap - w_bytes - (8 << 20))
    Nb = int(batch_block)
    assert N % Nb == 0, "batch_block must divide N"

    vmem_est = Nb * per_elem + 2 * w_bytes
    if vmem_est + (4 << 20) > vmem_cap:
        # TODO(synk): S-tile grid axis with a two-pass instance norm for
        # working sets that exceed VMEM (needed for e.g. C=256, S=32^3 on v7x).
        raise NotImplementedError(
            "full-spatial block does not fit VMEM; S-tiled two-pass instance "
            "norm not implemented")
    vmem_limit = int(min(max(vmem_est + (4 << 20), 16 << 20), vmem_cap))

    out_shape = jax.ShapeDtypeStruct((N, Cout, S), x_ncdhw.dtype)

    def _call(weight_mode):
        def wspec(shape):
            if weight_mode is None:
                return pl.BlockSpec(shape, lambda n: (0, 0))
            return pl.BlockSpec(shape, lambda n: (0, 0), pipeline_mode=weight_mode)

        return pl.pallas_call(
            _bottleneck_kernel,
            out_shape=out_shape,
            grid=(N // Nb,),
            in_specs=[
                pl.BlockSpec((Nb, Cin, S), lambda n: (n, 0, 0)),
                wspec((planes, Cin)),
                wspec((planes, planes)),
                wspec((Cout, planes)),
            ],
            out_specs=pl.BlockSpec((Nb, Cout, S), lambda n: (n, 0, 0)),
            compiler_params=pltpu.CompilerParams(
                dimension_semantics=("parallel",),
                vmem_limit_bytes=vmem_limit),
        )(x_ncs, w1, w2, w3)

    try:
        # Weight blocks never change across the grid -> single VMEM buffer.
        out_ncs = _call(pl.Buffered(1))
    except Exception:
        # Fallback if this Pallas build rejects 1-deep buffering.
        out_ncs = _call(None)

    return out_ncs.reshape(N, Cout, D, H, W)


def reference_forward(x, w1, w2, w3, conv_dtype=None):
    """Pure-JAX reference with PyTorch semantics (1x1x1 convs + InstanceNorm3d).

    conv_dtype (e.g. jnp.bfloat16) mirrors the kernel's reduced-precision MXU
    operands so the mixed-precision path can be checked at a tight tolerance.
    """
    x32 = x.astype(jnp.float32)

    def inorm(h):
        mean = jnp.mean(h, axis=(2, 3, 4), keepdims=True)
        var = jnp.mean((h - mean) ** 2, axis=(2, 3, 4), keepdims=True)
        return (h - mean) * lax.rsqrt(var + EPS)

    def pconv(h, w):
        d = jnp.float32 if conv_dtype is None else conv_dtype
        return jnp.einsum('ncdhw,oc->nodhw', h.astype(d), w.astype(d),
                          preferred_element_type=jnp.float32,
                          precision=lax.Precision.HIGHEST)

    out = jnp.maximum(inorm(pconv(x32, w1)), 0.0)
    out = jnp.maximum(inorm(pconv(out, w2)), 0.0)
    out = inorm(pconv(out, w3))
    return jnp.maximum(out + x32, 0.0)


if __name__ == "__main__":
    key = jax.random.PRNGKey(0)
    k_x1, k_x2, k1, k2, k3 = jax.random.split(key, 5)

    planes = 8
    inplanes = planes * 4          # 32: identity residual requires inplanes == 4*planes

    # Conv3d 1x1x1 weights stored as (Cout, Cin) (kernel dims squeezed out).
    w1 = jax.random.normal(k1, (planes, inplanes), dtype=jnp.float32) * 0.1
    w2 = jax.random.normal(k2, (planes, planes), dtype=jnp.float32) * 0.1
    w3 = jax.random.normal(k3, (planes * 4, planes), dtype=jnp.float32) * 0.1

    # --- Demo 1: f32 activations, S = 8^3 = 512 (lane-dense multiple of 128),
    #     N = 2 -> grid of 2 parallel steps. ---
    x1 = jax.random.normal(k_x1, (2, inplanes, 8, 8, 8), dtype=jnp.float32)
    out1 = bottleneck_forward(x1, w1, w2, w3)
    jax.block_until_ready(out1)
    ref1 = reference_forward(x1, w1, w2, w3)
    assert out1.shape == (2, planes * 4, 8, 8, 8)
    assert jnp.allclose(out1, ref1, atol=2e-3, rtol=2e-3)

    # --- Demo 2: bf16 HBM I/O + bf16 MXU operands, S = 7^3 = 343 (no pad /
    #     slice path), N = 4 -> two batch elements per grid step.  Checked
    #     against a precision-matched reference (bf16 operands, f32 accum);
    #     tolerance covers the bf16 output rounding. ---
    x2 = jax.random.normal(k_x2, (4, inplanes, 7, 7, 7),
                           dtype=jnp.float32).astype(jnp.bfloat16)
    out2 = bottleneck_forward(x2, w1, w2, w3, use_bf16_mxu=True)
    jax.block_until_ready(out2)
    ref2 = reference_forward(x2, w1, w2, w3, conv_dtype=jnp.bfloat16)
    assert out2.dtype == jnp.bfloat16
    assert out2.shape == (4, planes * 4, 7, 7, 7)
    assert jnp.allclose(out2.astype(jnp.float32), ref2, atol=3e-2, rtol=3e-2)

    print("KERNEL_OK")
</pallas_src>

<mosaic_0001>
module attributes {stable_mosaic.version = 11 : i64} {
  func.func @_bottleneck_kernel(%arg0: i32, %arg1: memref<1x32x512xf32, #tpu.memory_space<vmem>>, %arg2: memref<8x32xf32, #tpu.memory_space<vmem>>, %arg3: memref<8x8xf32, #tpu.memory_space<vmem>>, %arg4: memref<32x8xf32, #tpu.memory_space<vmem>>, %arg5: memref<1x32x512xf32, #tpu.memory_space<vmem>>) attributes {dimension_semantics = [#tpu.dimension_semantics<parallel>], iteration_bounds = array<i64: 2>, scalar_prefetch = 0 : i64, scratch_operands = 0 : i64, tpu.core_type = #tpu.core_type<tc>, window_params = [{transform_indices = @transform_0, window_bounds = array<i64: 1, 32, 512>}, {pipeline_mode = #tpu.pipeline_mode<synchronous>, transform_indices = @transform_1, window_bounds = array<i64: 8, 32>}, {pipeline_mode = #tpu.pipeline_mode<synchronous>, transform_indices = @transform_2, window_bounds = array<i64: 8, 8>}, {pipeline_mode = #tpu.pipeline_mode<synchronous>, transform_indices = @transform_3, window_bounds = array<i64: 32, 8>}, {transform_indices = @transform_4, window_bounds = array<i64: 1, 32, 512>}]} {
    %c0 = arith.constant 0 : index
    %c0_0 = arith.constant 0 : index
    %0 = vector.load %arg2[%c0, %c0_0] : memref<8x32xf32, #tpu.memory_space<vmem>>, vector<8x32xf32>
    %c0_1 = arith.constant 0 : index
    %c0_2 = arith.constant 0 : index
    %1 = vector.load %arg3[%c0_1, %c0_2] : memref<8x8xf32, #tpu.memory_space<vmem>>, vector<8x8xf32>
    %c0_3 = arith.constant 0 : index
    %c0_4 = arith.constant 0 : index
    %2 = vector.load %arg4[%c0_3, %c0_4] : memref<32x8xf32, #tpu.memory_space<vmem>>, vector<32x8xf32>
    %cst = arith.constant 0.001953125 : f32
    %c0_i32 = arith.constant 0 : i32
    %3 = arith.index_cast %c0_i32 : i32 to index
    %c0_5 = arith.constant 0 : index
    %c0_6 = arith.constant 0 : index
    %4 = vector.load %arg1[%3, %c0_5, %c0_6] : memref<1x32x512xf32, #tpu.memory_space<vmem>>, vector<1x32x512xf32>
    %5 = vector.shape_cast %4 : vector<1x32x512xf32> to vector<32x512xf32>
    %cst_7 = arith.constant dense<0.000000e+00> : vector<8x512xf32>
    %6 = tpu.matmul %0, %5, %cst_7 {dimension_numbers = #tpu.dot_dimension_numbers<[1], [0], [0], [1], [0, 0, 1, 1], [], []>} : vector<8x32xf32>, vector<32x512xf32>, vector<8x512xf32> -> vector<8x512xf32>
    %cst_8 = arith.constant dense<0.000000e+00> : vector<8xf32>
    %7 = vector.multi_reduction <add>, %6, %cst_8 [1] : vector<8x512xf32> to vector<8xf32>
    %8 = vector.shape_cast %7 : vector<8xf32> to vector<8x1xf32>
    %9 = vector.broadcast %cst : f32 to vector<8x1xf32>
    %10 = arith.mulf %8, %9 : vector<8x1xf32>
    %11 = vector.broadcast %10 : vector<8x1xf32> to vector<8x512xf32>
    %12 = arith.subf %6, %11 : vector<8x512xf32>
    %13 = arith.mulf %12, %12 : vector<8x512xf32>
    %cst_9 = arith.constant dense<0.000000e+00> : vector<8xf32>
    %14 = vector.multi_reduction <add>, %13, %cst_9 [1] : vector<8x512xf32> to vector<8xf32>
    %15 = vector.shape_cast %14 : vector<8xf32> to vector<8x1xf32>
    %16 = vector.broadcast %cst : f32 to vector<8x1xf32>
    %17 = arith.mulf %15, %16 : vector<8x1xf32>
    %cst_10 = arith.constant 9.99999974E-6 : f32
    %18 = vector.broadcast %cst_10 : f32 to vector<8x1xf32>
    %19 = arith.addf %17, %18 : vector<8x1xf32>
    %20 = math.rsqrt %19 : vector<8x1xf32>
    %21 = vector.broadcast %20 : vector<8x1xf32> to vector<8x512xf32>
    %22 = arith.mulf %12, %21 : vector<8x512xf32>
    %cst_11 = arith.constant 0.000000e+00 : f32
    %23 = vector.broadcast %cst_11 : f32 to vector<8x512xf32>
    %24 = arith.maximumf %22, %23 : vector<8x512xf32>
    %cst_12 = arith.constant dense<0.000000e+00> : vector<8x512xf32>
    %25 = tpu.matmul %1, %24, %cst_12 {dimension_numbers = #tpu.dot_dimension_numbers<[1], [0], [0], [1], [0, 0, 1, 1], [], []>} : vector<8x8xf32>, vector<8x512xf32>, vector<8x512xf32> -> vector<8x512xf32>
    %cst_13 = arith.constant dense<0.000000e+00> : vector<8xf32>
    %26 = vector.multi_reduction <add>, %25, %cst_13 [1] : vector<8x512xf32> to vector<8xf32>
    %27 = vector.shape_cast %26 : vector<8xf32> to vector<8x1xf32>
    %28 = vector.broadcast %cst : f32 to vector<8x1xf32>
    %29 = arith.mulf %27, %28 : vector<8x1xf32>
    %30 = vector.broadcast %29 : vector<8x1xf32> to vector<8x512xf32>
    %31 = arith.subf %25, %30 : vector<8x512xf32>
    %32 = arith.mulf %31, %31 : vector<8x512xf32>
    %cst_14 = arith.constant dense<0.000000e+00> : vector<8xf32>
    %33 = vector.multi_reduction <add>, %32, %cst_14 [1] : vector<8x512xf32> to vector<8xf32>
    %34 = vector.shape_cast %33 : vector<8xf32> to vector<8x1xf32>
    %35 = vector.broadcast %cst : f32 to vector<8x1xf32>
    %36 = arith.mulf %34, %35 : vector<8x1xf32>
    %cst_15 = arith.constant 9.99999974E-6 : f32
    %37 = vector.broadcast %cst_15 : f32 to vector<8x1xf32>
    %38 = arith.addf %36, %37 : vector<8x1xf32>
    %39 = math.rsqrt %38 : vector<8x1xf32>
    %40 = vector.broadcast %39 : vector<8x1xf32> to vector<8x512xf32>
    %41 = arith.mulf %31, %40 : vector<8x512xf32>
    %cst_16 = arith.constant 0.000000e+00 : f32
    %42 = vector.broadcast %cst_16 : f32 to vector<8x512xf32>
    %43 = arith.maximumf %41, %42 : vector<8x512xf32>
    %cst_17 = arith.constant dense<0.000000e+00> : vector<32x512xf32>
    %44 = tpu.matmul %2, %43, %cst_17 {dimension_numbers = #tpu.dot_dimension_numbers<[1], [0], [0], [1], [0, 0, 1, 1], [], []>} : vector<32x8xf32>, vector<8x512xf32>, vector<32x512xf32> -> vector<32x512xf32>
    %cst_18 = arith.constant dense<0.000000e+00> : vector<32xf32>
    %45 = vector.multi_reduction <add>, %44, %cst_18 [1] : vector<32x512xf32> to vector<32xf32>
    %46 = vector.shape_cast %45 : vector<32xf32> to vector<32x1xf32>
    %47 = vector.broadcast %cst : f32 to vector<32x1xf32>
    %48 = arith.mulf %46, %47 : vector<32x1xf32>
    %49 = vector.broadcast %48 : vector<32x1xf32> to vector<32x512xf32>
    %50 = arith.subf %44, %49 : vector<32x512xf32>
    %51 = arith.mulf %50, %50 : vector<32x512xf32>
    %cst_19 = arith.constant dense<0.000000e+00> : vector<32xf32>
    %52 = vector.multi_reduction <add>, %51, %cst_19 [1] : vector<32x512xf32> to vector<32xf32>
    %53 = vector.shape_cast %52 : vector<32xf32> to vector<32x1xf32>
    %54 = vector.broadcast %cst : f32 to vector<32x1xf32>
    %55 = arith.mulf %53, %54 : vector<32x1xf32>
    %cst_20 = arith.constant 9.99999974E-6 : f32
    %56 = vector.broadcast %cst_20 : f32 to vector<32x1xf32>
    %57 = arith.addf %55, %56 : vector<32x1xf32>
    %58 = math.rsqrt %57 : vector<32x1xf32>
    %59 = vector.broadcast %58 : vector<32x1xf32> to vector<32x512xf32>
    %60 = arith.mulf %50, %59 : vector<32x512xf32>
    %61 = arith.addf %60, %5 : vector<32x512xf32>
    %cst_21 = arith.constant 0.000000e+00 : f32
    %62 = vector.broadcast %cst_21 : f32 to vector<32x512xf32>
    %63 = arith.maximumf %61, %62 : vector<32x512xf32>
    %64 = arith.index_cast %c0_i32 : i32 to index
    %c0_22 = arith.constant 0 : index
    %c0_23 = arith.constant 0 : index
    %65 = vector.load %arg5[%64, %c0_22, %c0_23] : memref<1x32x512xf32, #tpu.memory_space<vmem>>, vector<1x32x512xf32>
    %66 = vector.shape_cast %65 : vector<1x32x512xf32> to vector<32x512xf32>
    %67 = vector.shape_cast %63 : vector<32x512xf32> to vector<1x32x512xf32>
    tpu.vector_store %arg5[%64, %c0_22, %c0_23], %67 {strides = array<i32>} : memref<1x32x512xf32, #tpu.memory_space<vmem>>, vector<1x32x512xf32>,
    %c1_i32 = arith.constant 1 : i32
    return
  }
  func.func @transform_0(%arg0: i32) -> (i32, i32, i32) {
    %c0_i32 = arith.constant 0 : i32
    %c0_i32_0 = arith.constant 0 : i32
    %c0_i32_1 = arith.constant 0 : i32
    return %arg0, %c0_i32, %c0_i32_0 : i32, i32, i32
  }
  func.func @transform_1(%arg0: i32) -> (i32, i32) {
    %c0_i32 = arith.constant 0 : i32
    %c0_i32_0 = arith.constant 0 : i32
    %c0_i32_1 = arith.constant 0 : i32
    return %c0_i32, %c0_i32_0 : i32, i32
  }
  func.func @transform_2(%arg0: i32) -> (i32, i32) {
    %c0_i32 = arith.constant 0 : i32
    %c0_i32_0 = arith.constant 0 : i32
    %c0_i32_1 = arith.constant 0 : i32
    return %c0_i32, %c0_i32_0 : i32, i32
  }
  func.func @transform_3(%arg0: i32) -> (i32, i32) {
    %c0_i32 = arith.constant 0 : i32
    %c0_i32_0 = arith.constant 0 : i32
    %c0_i32_1 = arith.constant 0 : i32
    return %c0_i32, %c0_i32_0 : i32, i32
  }
  func.func @transform_4(%arg0: i32) -> (i32, i32, i32) {
    %c0_i32 = arith.constant 0 : i32
    %c0_i32_0 = arith.constant 0 : i32
    %c0_i32_1 = arith.constant 0 : i32
    return %arg0, %c0_i32, %c0_i32_0 : i32, i32, i32
  }
}

module attributes {stable_mosaic.version = 11 : i64} {
  func.func @_bottleneck_kernel(%arg0: i32, %arg1: memref<1x32x512xf32, #tpu.memory_space<vmem>>, %arg2: memref<8x32xf32, #tpu.memory_space<vmem>>, %arg3: memref<8x8xf32, #tpu.memory_space<vmem>>, %arg4: memref<32x8xf32, #tpu.memory_space<vmem>>, %arg5: memref<1x32x512xf32, #tpu.memory_space<vmem>>) attributes {dimension_semantics = [#tpu.dimension_semantics<parallel>], iteration_bounds = array<i64: 2>, scalar_prefetch = 0 : i64, scratch_operands = 0 : i64, tpu.core_type = #tpu.core_type<tc>, window_params = [{transform_indices = @transform_0, window_bounds = array<i64: 1, 32, 512>}, {pipeline_mode = #tpu.pipeline_mode<synchronous>, transform_indices = @transform_1, window_bounds = array<i64: 8, 32>}, {pipeline_mode = #tpu.pipeline_mode<synchronous>, transform_indices = @transform_2, window_bounds = array<i64: 8, 8>}, {pipeline_mode = #tpu.pipeline_mode<synchronous>, transform_indices = @transform_3, window_bounds = array<i64: 32, 8>}, {transform_indices = @transform_4, window_bounds = array<i64: 1, 32, 512>}]} {
    %c0 = arith.constant 0 : index
    %c0_0 = arith.constant 0 : index
    %0 = vector.load %arg2[%c0, %c0_0] : memref<8x32xf32, #tpu.memory_space<vmem>>, vector<8x32xf32>
    %c0_1 = arith.constant 0 : index
    %c0_2 = arith.constant 0 : index
    %1 = vector.load %arg3[%c0_1, %c0_2] : memref<8x8xf32, #tpu.memory_space<vmem>>, vector<8x8xf32>
    %c0_3 = arith.constant 0 : index
    %c0_4 = arith.constant 0 : index
    %2 = vector.load %arg4[%c0_3, %c0_4] : memref<32x8xf32, #tpu.memory_space<vmem>>, vector<32x8xf32>
    %cst = arith.constant 0.001953125 : f32
    %c0_i32 = arith.constant 0 : i32
    %3 = arith.index_cast %c0_i32 : i32 to index
    %c0_5 = arith.constant 0 : index
    %c0_6 = arith.constant 0 : index
    %4 = vector.load %arg1[%3, %c0_5, %c0_6] : memref<1x32x512xf32, #tpu.memory_space<vmem>>, vector<1x32x512xf32>
    %5 = vector.shape_cast %4 : vector<1x32x512xf32> to vector<32x512xf32>
    %cst_7 = arith.constant dense<0.000000e+00> : vector<8x512xf32>
    %6 = tpu.matmul %0, %5, %cst_7 {dimension_numbers = #tpu.dot_dimension_numbers<[1], [0], [0], [1], [0, 0, 1, 1], [], []>} : vector<8x32xf32>, vector<32x512xf32>, vector<8x512xf32> -> vector<8x512xf32>
    %cst_8 = arith.constant dense<0.000000e+00> : vector<8xf32>
    %7 = vector.multi_reduction <add>, %6, %cst_8 [1] : vector<8x512xf32> to vector<8xf32>
    %8 = vector.shape_cast %7 : vector<8xf32> to vector<8x1xf32>
    %9 = vector.broadcast %cst : f32 to vector<8x1xf32>
    %10 = arith.mulf %8, %9 : vector<8x1xf32>
    %11 = vector.broadcast %10 : vector<8x1xf32> to vector<8x512xf32>
    %12 = arith.subf %6, %11 : vector<8x512xf32>
    %13 = arith.mulf %12, %12 : vector<8x512xf32>
    %cst_9 = arith.constant dense<0.000000e+00> : vector<8xf32>
    %14 = vector.multi_reduction <add>, %13, %cst_9 [1] : vector<8x512xf32> to vector<8xf32>
    %15 = vector.shape_cast %14 : vector<8xf32> to vector<8x1xf32>
    %16 = vector.broadcast %cst : f32 to vector<8x1xf32>
    %17 = arith.mulf %15, %16 : vector<8x1xf32>
    %cst_10 = arith.constant 9.99999974E-6 : f32
    %18 = vector.broadcast %cst_10 : f32 to vector<8x1xf32>
    %19 = arith.addf %17, %18 : vector<8x1xf32>
    %20 = math.rsqrt %19 : vector<8x1xf32>
    %21 = vector.broadcast %20 : vector<8x1xf32> to vector<8x512xf32>
    %22 = arith.mulf %12, %21 : vector<8x512xf32>
    %cst_11 = arith.constant 0.000000e+00 : f32
    %23 = vector.broadcast %cst_11 : f32 to vector<8x512xf32>
    %24 = arith.maximumf %22, %23 : vector<8x512xf32>
    %cst_12 = arith.constant dense<0.000000e+00> : vector<8x512xf32>
    %25 = tpu.matmul %1, %24, %cst_12 {dimension_numbers = #tpu.dot_dimension_numbers<[1], [0], [0], [1], [0, 0, 1, 1], [], []>} : vector<8x8xf32>, vector<8x512xf32>, vector<8x512xf32> -> vector<8x512xf32>
    %cst_13 = arith.constant dense<0.000000e+00> : vector<8xf32>
    %26 = vector.multi_reduction <add>, %25, %cst_13 [1] : vector<8x512xf32> to vector<8xf32>
    %27 = vector.shape_cast %26 : vector<8xf32> to vector<8x1xf32>
    %28 = vector.broadcast %cst : f32 to vector<8x1xf32>
    %29 = arith.mulf %27, %28 : vector<8x1xf32>
    %30 = vector.broadcast %29 : vector<8x1xf32> to vector<8x512xf32>
    %31 = arith.subf %25, %30 : vector<8x512xf32>
    %32 = arith.mulf %31, %31 : vector<8x512xf32>
    %cst_14 = arith.constant dense<0.000000e+00> : vector<8xf32>
    %33 = vector.multi_reduction <add>, %32, %cst_14 [1] : vector<8x512xf32> to vector<8xf32>
    %34 = vector.shape_cast %33 : vector<8xf32> to vector<8x1xf32>
    %35 = vector.broadcast %cst : f32 to vector<8x1xf32>
    %36 = arith.mulf %34, %35 : vector<8x1xf32>
    %cst_15 = arith.constant 9.99999974E-6 : f32
    %37 = vector.broadcast %cst_15 : f32 to vector<8x1xf32>
    %38 = arith.addf %36, %37 : vector<8x1xf32>
    %39 = math.rsqrt %38 : vector<8x1xf32>
    %40 = vector.broadcast %39 : vector<8x1xf32> to vector<8x512xf32>
    %41 = arith.mulf %31, %40 : vector<8x512xf32>
    %cst_16 = arith.constant 0.000000e+00 : f32
    %42 = vector.broadcast %cst_16 : f32 to vector<8x512xf32>
    %43 = arith.maximumf %41, %42 : vector<8x512xf32>
    %cst_17 = arith.constant dense<0.000000e+00> : vector<32x512xf32>
    %44 = tpu.matmul %2, %43, %cst_17 {dimension_numbers = #tpu.dot_dimension_numbers<[1], [0], [0], [1], [0, 0, 1, 1], [], []>} : vector<32x8xf32>, vector<8x512xf32>, vector<32x512xf32> -> vector<32x512xf32>
    %cst_18 = arith.constant dense<0.000000e+00> : vector<32xf32>
    %45 = vector.multi_reduction <add>, %44, %cst_18 [1] : vector<32x512xf32> to vector<32xf32>
    %46 = vector.shape_cast %45 : vector<32xf32> to vector<32x1xf32>
    %47 = vector.broadcast %cst : f32 to vector<32x1xf32>
    %48 = arith.mulf %46, %47 : vector<32x1xf32>
    %49 = vector.broadcast %48 : vector<32x1xf32> to vector<32x512xf32>
    %50 = arith.subf %44, %49 : vector<32x512xf32>
    %51 = arith.mulf %50, %50 : vector<32x512xf32>
    %cst_19 = arith.constant dense<0.000000e+00> : vector<32xf32>
    %52 = vector.multi_reduction <add>, %51, %cst_19 [1] : vector<32x512xf32> to vector<32xf32>
    %53 = vector.shape_cast %52 : vector<32xf32> to vector<32x1xf32>
    %54 = vector.broadcast %cst : f32 to vector<32x1xf32>
    %55 = arith.mulf %53, %54 : vector<32x1xf32>
    %cst_20 = arith.constant 9.99999974E-6 : f32
    %56 = vector.broadcast %cst_20 : f32 to vector<32x1xf32>
    %57 = arith.addf %55, %56 : vector<32x1xf32>
    %58 = math.rsqrt %57 : vector<32x1xf32>
    %59 = vector.broadcast %58 : vector<32x1xf32> to vector<32x512xf32>
    %60 = arith.mulf %50, %59 : vector<32x512xf32>
    %61 = arith.addf %60, %5 : vector<32x512xf32>
    %cst_21 = arith.constant 0.000000e+00 : f32
    %62 = vector.broadcast %cst_21 : f32 to vector<32x512xf32>
    %63 = arith.maximumf %61, %62 : vector<32x512xf32>
    %64 = arith.index_cast %c0_i32 : i32 to index
    %c0_22 = arith.constant 0 : index
    %c0_23 = arith.constant 0 : index
    %65 = vector.load %arg5[%64, %c0_22, %c0_23] : memref<1x32x512xf32, #tpu.memory_space<vmem>>, vector<1x32x512xf32>
    %66 = vector.shape_cast %65 : vector<1x32x512xf32> to vector<32x512xf32>
    %67 = vector.shape_cast %63 : vector<32x512xf32> to vector<1x32x512xf32>
    tpu.vector_store %arg5[%64, %c0_22, %c0_23], %67 {strides = array<i32>} : memref<1x32x512xf32, #tpu.memory_space<vmem>>, vector<1x32x512xf32>,
    %c1_i32 = arith.constant 1 : i32
    return
  }
  func.func @transform_0(%arg0: i32) -> (i32, i32, i32) {
    %c0_i32 = arith.constant 0 : i32
    %c0_i32_0 = arith.constant 0 : i32
    %c0_i32_1 = arith.constant 0 : i32
    return %arg0, %c0_i32, %c0_i32_0 : i32, i32, i32
  }
  func.func @transform_1(%arg0: i32) -> (i32, i32) {
    %c0_i32 = arith.constant 0 : i32
    %c0_i32_0 = arith.constant 0 : i32
    %c0_i32_1 = arith.constant 0 : i32
    return %c0_i32, %c0_i32_0 : i32, i32
  }
  func.func @transform_2(%arg0: i32) -> (i32, i32) {
    %c0_i32 = arith.constant 0 : i32
    %c0_i32_0 = arith.constant 0 : i32
    %c0_i32_1 = arith.constant 0 : i32
    return %c0_i32, %c0_i32_0 : i32, i32
  }
  func.func @transform_3(%arg0: i32) -> (i32, i32) {
    %c0_i32 = arith.constant 0 : i32
    %c0_i32_0 = arith.constant 0 : i32
    %c0_i32_1 = arith.constant 0 : i32
    return %c0_i32, %c0_i32_0 : i32, i32
  }
  func.func @transform_4(%arg0: i32) -> (i32, i32, i32) {
    %c0_i32 = arith.constant 0 : i32
    %c0_i32_0 = arith.constant 0 : i32
    %c0_i32_1 = arith.constant 0 : i32
    return %arg0, %c0_i32, %c0_i32_0 : i32, i32, i32
  }
}

</mosaic_0001>

<llo_original>
// kernel: tpu_custom_call.1
$region0: #{tpu_custom_call.1}
  #allocation0 [shape = 'u32[]', space=smem, size = 0x4, offset = 0x4, fixed_abs, tag = 'smem constant byte address 0x4 - core index']
  #allocation1 [shape = 'u32[72,128]{1,0:T(1,128)}', space=vmem, size = 0x9000, scoped, tag = 'internal scratch']
  %s0 = inlined_call_operand.hbm [shape: f32[2,32,512], index: 0, kind: input, shape index: {}]
  %s1 = inlined_call_operand.vmem [shape: f32[8,32], index: 1, kind: input, shape index: {}]
  %s2 = inlined_call_operand.vmem [shape: f32[8,8], index: 2, kind: input, shape index: {}]
  %s3 = inlined_call_operand.vmem [shape: f32[32,8], index: 3, kind: input, shape index: {}]
  %s4 = inlined_call_operand.hbm [shape: f32[2,32,512], index: 4, kind: output, shape index: {}]
  %s5 = sld [smem:[#allocation0]]
  $region53: #{tpu_custom_call.1} parent=0
    _
  %s7 = ssub.s32 1, %s5
  %s8 = scalar_select 0, %s7, %s5
  $region1: #{tpu_custom_call.1} parent=0
    #allocation2 [shape = 'u8[131072]{0}', space=vmem, size = 0x20000, scoped, tag = 'input window, operand 0']
    #allocation3 [shape = 's32[2]{0}', space=sflag, size = 0x8, scoped, tag = 'scoped memory for tpu_custom_call.1']
    #allocation4 [shape = 's32[2]{0}', space=sflag, size = 0x8, scoped, tag = 'scoped memory for tpu_custom_call.1']
    #allocation5 [shape = 'u8[131072]{0}', space=vmem, size = 0x20000, scoped, tag = 'output window, operand 0']
    %9 = vsyncpa [#allocation3], 0
    %s10 = scalar_lea.sflag [#allocation3], 1
    %11 = vsyncpa %s10, 0
    %12 = vsyncpa [#allocation4], 0
    %s13 = scalar_lea.sflag [#allocation4], 1
    %14 = vsyncpa %s13, 0
    loop: start=0, step=1, limit=4
    $region2: #{tpu_custom_call.1} parent=1 // loop_pre_header
      _
    $region3: #{tpu_custom_call.1} parent=1 // loop_header
      %s16 = sphi 0, %s20
      %p17 = scmp.ge.s32.totalorder %s16, 4
      %s26 = sphi 0, %s28
      %s29 = sphi 0, %s26
      %s30 = sphi 0, %s29
      %s46 = sphi 0, %s30
      %s50 = sphi 0, %s50
      %s52 = sphi 0, %s50
      %s53 = sphi 0, %s52
      %s67 = sphi 0, %s53
      %s71 = sphi 0, %s71
      %s73 = sphi 0, %s71
      %s74 = sphi 0, %s73
      %s88 = sphi 0, %s74
      %s92 = sphi 0, %s92
      %s94 = sphi 0, %s92
      %s95 = sphi 0, %s94
      %s109 = sphi 0, %s95
      %s115 = sphi 0, %s117
      %s118 = sphi 0, %s115
      %s119 = sphi 0, %s118
      %s135 = sphi 0, %s119
    $region4: #{tpu_custom_call.1} parent=1 // loop_header_branch
      %19 = sbr.rel (%p17) target = $region8
    $region5: #{tpu_custom_call.1} parent=1 // loop_body
      %s21 = ssub.s32 %s16, 1
      %s22 = ssub.s32 %s16, 2
      %s23 = sadd.s32 %s16, 1
      %s24 = ssub.s32 %s16, %s23
      %p25 = scmp.eq.s32.totalorder %s24, 0
      %s27 = sadd.s32 %s26, 1
      %s28 = scalar_select %p25, %s26, %s27
      %p31 = pneg %p25
      %p32 = scmp.eq.s32.totalorder %s16, 1
      %p33 = por %p31, %p32
      %p34 = scmp.ne.s32.totalorder %s26, %s29
      %p35 = scmp.eq.s32.totalorder %s16, 0
      %p36 = por %p34, %p35
      %p37 = scmp.ne.s32.totalorder %s26, %s29
      %p38 = scmp.eq.s32.totalorder %s21, 1
      %p39 = por %p37, %p38
      %p40 = scmp.ne.s32.totalorder %s29, %s30
      %p41 = scmp.eq.s32.totalorder %s21, 0
      %p42 = por %p40, %p41
      %p43 = scmp.ne.s32.totalorder %s29, %s30
      %p44 = scmp.eq.s32.totalorder %s22, 1
      %p45 = por %p43, %p44
      %p47 = scmp.ne.s32.totalorder %s30, %s46
      %p48 = scmp.eq.s32.totalorder %s22, 0
      %p49 = por %p47, %p48
      %s51 = sadd.s32 %s50, 1
      %p54 = scmp.eq.s32.totalorder %s16, 1
      %p55 = scmp.ne.s32.totalorder %s50, %s52
      %p56 = scmp.eq.s32.totalorder %s16, 0
      %p57 = por %p55, %p56
      %p58 = scmp.ne.s32.totalorder %s50, %s52
      %p59 = scmp.eq.s32.totalorder %s21, 1
      %p60 = por %p58, %p59
      %p61 = scmp.ne.s32.totalorder %s52, %s53
      %p62 = scmp.eq.s32.totalorder %s21, 0
      %p63 = por %p61, %p62
      %p64 = scmp.ne.s32.totalorder %s52, %s53
      %p65 = scmp.eq.s32.totalorder %s22, 1
      %p66 = por %p64, %p65
      %p68 = scmp.ne.s32.totalorder %s53, %s67
      %p69 = scmp.eq.s32.totalorder %s22, 0
      %p70 = por %p68, %p69
      %s72 = sadd.s32 %s71, 1
      %p75 = scmp.eq.s32.totalorder %s16, 1
      %p76 = scmp.ne.s32.totalorder %s71, %s73
      %p77 = scmp.eq.s32.totalorder %s16, 0
      %p78 = por %p76, %p77
      %p79 = scmp.ne.s32.totalorder %s71, %s73
      %p80 = scmp.eq.s32.totalorder %s21, 1
      %p81 = por %p79, %p80
      %p82 = scmp.ne.s32.totalorder %s73, %s74
      %p83 = scmp.eq.s32.totalorder %s21, 0
      %p84 = por %p82, %p83
      %p85 = scmp.ne.s32.totalorder %s73, %s74
      %p86 = scmp.eq.s32.totalorder %s22, 1
      %p87 = por %p85, %p86
      %p89 = scmp.ne.s32.totalorder %s74, %s88
      %p90 = scmp.eq.s32.totalorder %s22, 0
      %p91 = por %p89, %p90
      %s93 = sadd.s32 %s92, 1
      %p96 = scmp.eq.s32.totalorder %s16, 1
      %p97 = scmp.ne.s32.totalorder %s92, %s94
      %p98 = scmp.eq.s32.totalorder %s16, 0
      %p99 = por %p97, %p98
      %p100 = scmp.ne.s32.totalorder %s92, %s94
      %p101 = scmp.eq.s32.totalorder %s21, 1
      %p102 = por %p100, %p101
      %p103 = scmp.ne.s32.totalorder %s94, %s95
      %p104 = scmp.eq.s32.totalorder %s21, 0
      %p105 = por %p103, %p104
      %p106 = scmp.ne.s32.totalorder %s94, %s95
      %p107 = scmp.eq.s32.totalorder %s22, 1
      %p108 = por %p106, %p107
      %p110 = scmp.ne.s32.totalorder %s95, %s109
      %p111 = scmp.eq.s32.totalorder %s22, 0
      %p112 = por %p110, %p111
      %s113 = ssub.s32 %s16, %s23
      %p114 = scmp.eq.s32.totalorder %s113, 0
      %s116 = sadd.s32 %s115, 1
      %s117 = scalar_select %p114, %s115, %s116
      %p120 = pneg %p114
      %p121 = scmp.eq.s32.totalorder %s16, 1
      %p122 = por %p120, %p121
      %p123 = scmp.ne.s32.totalorder %s115, %s118
      %p124 = scmp.eq.s32.totalorder %s16, 0
      %p125 = por %p123, %p124
      %p126 = scmp.ne.s32.totalorder %s115, %s118
      %p127 = scmp.eq.s32.totalorder %s21, 1
      %p128 = por %p126, %p127
      %p129 = scmp.ne.s32.totalorder %s118, %s119
      %p130 = scmp.eq.s32.totalorder %s21, 0
      %p131 = por %p129, %p130
      %p132 = scmp.ne.s32.totalorder %s118, %s119
      %p133 = scmp.eq.s32.totalorder %s22, 1
      %p134 = por %p132, %p133
      %p136 = scmp.ne.s32.totalorder %s119, %s135
      %p137 = scmp.eq.s32.totalorder %s22, 0
      %p138 = por %p136, %p137
      %p139 = scmp.le.s32.totalorder 1, %s16
      %p140 = scmp.lt.s32.totalorder %s16, 3
      %p141 = pnand %p139, %p140
      %p142 = pneg %p141
      // Predicated region
      $region9: #{tpu_custom_call.1} parent=5 // pred_check
        _
      $region10: #{tpu_custom_call.1} parent=5 // pred_check_branch
        %144 = sbr.rel (%p141) target = $region12
      $region11: #{tpu_custom_call.1} parent=5 // pred_region
        %s145 = ssub.s32 %s16, 1
        // Predicated region
        $region13: #{tpu_custom_call.1} parent=11 // pred_check
          %p146 = pneg %p63
        $region14: #{tpu_custom_call.1} parent=11 // pred_check_branch
          %148 = sbr.rel (%p146) target = $region16
        $region15: #{tpu_custom_call.1} parent=11 // pred_region
          _
        $region16: #{tpu_custom_call.1} parent=11 // pred_fallthru
          _
        // Predicated region
        $region17: #{tpu_custom_call.1} parent=11 // pred_check
          %p149 = pneg %p84
        $region18: #{tpu_custom_call.1} parent=11 // pred_check_branch
          %151 = sbr.rel (%p149) target = $region20
        $region19: #{tpu_custom_call.1} parent=11 // pred_region
          _
        $region20: #{tpu_custom_call.1} parent=11 // pred_fallthru
          _
        // Predicated region
        $region21: #{tpu_custom_call.1} parent=11 // pred_check
          %p152 = pneg %p105
        $region22: #{tpu_custom_call.1} parent=11 // pred_check_branch
          %154 = sbr.rel (%p152) target = $region24
        $region23: #{tpu_custom_call.1} parent=11 // pred_region
          _
        $region24: #{tpu_custom_call.1} parent=11 // pred_fallthru
          _
      $region12: #{tpu_custom_call.1} parent=5 // pred_fallthru
        _
      %p155 = scmp.lt.s32.totalorder %s16, 2
      // Predicated region
      $region25: #{tpu_custom_call.1} parent=5 // pred_check
        %p156 = pneg %p155
      $region26: #{tpu_custom_call.1} parent=5 // pred_check_branch
        %158 = sbr.rel (%p156) target = $region28
      $region27: #{tpu_custom_call.1} parent=5 // pred_region
        // Predicated region
        $region29: #{tpu_custom_call.1} parent=27 // pred_check
          %p159 = pneg %p36
        $region30: #{tpu_custom_call.1} parent=27 // pred_check_branch
          %161 = sbr.rel (%p159) target = $region32
        $region31: #{tpu_custom_call.1} parent=27 // pred_region
          %s162 = sand.u32 %s26, 1
          %s163 = scalar_lea.sflag [#allocation3], %s162
          %s164 = sand.u32 %s26, 1
          %s165 = smul.addr %s164, 128
          %s166 = scalar_lea.vmem [#allocation2], %s165
          %168 = vsyncadd %s163, 0
          %s169 = smul.addr %s16, 16
          %s170 = smul.addr %s169, 8
          %s171 = scalar_lea.hbm %s0, %s170
          %s172 = sshll.u32 %s171, 4
          %s173 = int_to_ptr.hbm [resolvable:$true] %s172
          %s174 = sshll.u32 %s166, 4
          %s175 = int_to_ptr.vmem [resolvable:$true] %s174
          %180 = dma.hbm_to_vmem [thread:$0]  %s173, 2048, %s175, %s163, 512, 512, 32
        $region32: #{tpu_custom_call.1} parent=27 // pred_fallthru
          _
      $region28: #{tpu_custom_call.1} parent=5 // pred_fallthru
        _
      %p181 = scmp.le.s32.totalorder 1, %s16
      %p182 = scmp.lt.s32.totalorder %s16, 3
      %p183 = pnand %p181, %p182
      %p184 = pneg %p183
      // Predicated region
      $region33: #{tpu_custom_call.1} parent=5 // pred_check
        _
      $region34: #{tpu_custom_call.1} parent=5 // pred_check_branch
        %186 = sbr.rel (%p183) target = $region36
      $region35: #{tpu_custom_call.1} parent=5 // pred_region
        %s187 = ssub.s32 %s16, 1
        %s188 = sand.u32 %s29, 1
        %s189 = scalar_lea.sflag [#allocation3], %s188
        %s190 = sand.u32 %s29, 1
        %s191 = smul.addr %s190, 128
        %s192 = scalar_lea.vmem [#allocation2], %s191
        // Predicated region
        $region37: #{tpu_custom_call.1} parent=35 // pred_check
          %p193 = pneg %p42
        $region38: #{tpu_custom_call.1} parent=35 // pred_check_branch
          %195 = sbr.rel (%p193) target = $region40
        $region39: #{tpu_custom_call.1} parent=35 // pred_region
          %197 = dma.done %s189, 2048
        $region40: #{tpu_custom_call.1} parent=35 // pred_fallthru
          _
        %s198 = sand.u32 %s29, 1
        %s199 = scalar_lea.sflag [#allocation3], %s198
        %s200 = sand.u32 %s29, 1
        %s201 = smul.addr %s200, 128
        %s202 = scalar_lea.vmem [#allocation2], %s201
        %p203 = pneg %p42
        %p204 = pneg %p39
        %p205 = pneg %p63
        %p206 = pneg %p60
        %p207 = pneg %p84
        %p208 = pneg %p81
        %p209 = pneg %p105
        %p210 = pneg %p102
        %p211 = pneg %p131
        %p212 = pneg %p128
        %s213 = sand.u32 %s118, 1
        %s214 = scalar_lea.sflag [#allocation4], %s213
        %s215 = sand.u32 %s118, 1
        %s216 = smul.addr %s215, 128
        %s217 = scalar_lea.vmem [#allocation5], %s216
        %v218 = vld [vmem:[%s1] sm:$0xff]
        %v219 = vld [vmem:[%s2] sm:$0xff]
        %v220 = vld [vmem:[%s3] sm:$0xff]
        %v221 = vld [vmem:[%s3 + $0x8] sm:$0xff]
        %v222 = vld [vmem:[%s3 + $0x10] sm:$0xff]
        %v223 = vld [vmem:[%s3 + $0x18] sm:$0xff]
        %v224 = vld [vmem:[%s192] sm:$0xff]
        %v225 = vld [vmem:[%s192 + $0x8] sm:$0xff]
        %v226 = vld [vmem:[%s192 + $0x10] sm:$0xff]
        %v227 = vld [vmem:[%s192 + $0x18] sm:$0xff]
        %v228 = vld [vmem:[%s192 + $0x20] sm:$0xff]
        %v229 = vld [vmem:[%s192 + $0x28] sm:$0xff]
        %v230 = vld [vmem:[%s192 + $0x30] sm:$0xff]
        %v231 = vld [vmem:[%s192 + $0x38] sm:$0xff]
        %v232 = vld [vmem:[%s192 + $0x40] sm:$0xff]
        %v233 = vld [vmem:[%s192 + $0x48] sm:$0xff]
        %v234 = vld [vmem:[%s192 + $0x50] sm:$0xff]
        %v235 = vld [vmem:[%s192 + $0x58] sm:$0xff]
        %v236 = vld [vmem:[%s192 + $0x60] sm:$0xff]
        %v237 = vld [vmem:[%s192 + $0x68] sm:$0xff]
        %v238 = vld [vmem:[%s192 + $0x70] sm:$0xff]
        %v239 = vld [vmem:[%s192 + $0x78] sm:$0xff]
        %vm240 = vcmask 261120
        %v242 = vsel %vm240, %v218, 0
        %244 = vmatpush.msra.mxu0 0.0
        %245 = vmatpush.msra.mxu0 0.0
        %246 = vmatpush.msra.mxu0 0.0
        %247 = vmatpush.msra.mxu0 0.0
        %248 = vmatpush.msra.mxu0 0.0
        %249 = vmatpush.msra.mxu0 0.0
        %250 = vmatpush.msra.mxu0 0.0
        %251 = vmatpush.msra.mxu0 0.0
        %252 = vmatpush.msra.mxu0 0.0
        %253 = vmatpush.msra.mxu0 0.0
        %254 = vmatpush.msra.mxu0 0.0
        %255 = vmatpush.msra.mxu0 0.0
        %256 = vmatpush.msra.mxu0 %v236
        %257 = vmatpush.msra.mxu0 %v232
        %258 = vmatpush.msra.mxu0 %v228
        %259 = vmatpush.msra.mxu0 %v224
        %260 = vmatmul.f32.gmra.mxu0 %v242
        %v261 = vpop.f32.mrf.mxu0
        %v262 = vadd.f32 0.0, %v261
        %263 = vdwg.mxu0
        %264 = vmatpush.msra.mxu0 0.0
        %265 = vmatpush.msra.mxu0 0.0
        %266 = vmatpush.msra.mxu0 0.0
        %267 = vmatpush.msra.mxu0 0.0
        %268 = vmatpush.msra.mxu0 0.0
        %269 = vmatpush.msra.mxu0 0.0
        %270 = vmatpush.msra.mxu0 0.0
        %271 = vmatpush.msra.mxu0 0.0
        %272 = vmatpush.msra.mxu0 0.0
        %273 = vmatpush.msra.mxu0 0.0
        %274 = vmatpush.msra.mxu0 0.0
        %275 = vmatpush.msra.mxu0 0.0
        %276 = vmatpush.msra.mxu0 %v237
        %277 = vmatpush.msra.mxu0 %v233
        %278 = vmatpush.msra.mxu0 %v229
        %279 = vmatpush.msra.mxu0 %v225
        %280 = vmatmul.f32.gmra.mxu0 %v242
        %v281 = vpop.f32.mrf.mxu0
        %v282 = vadd.f32 0.0, %v281
        %283 = vdwg.mxu0
        %284 = vmatpush.msra.mxu0 0.0
        %285 = vmatpush.msra.mxu0 0.0
        %286 = vmatpush.msra.mxu0 0.0
        %287 = vmatpush.msra.mxu0 0.0
        %288 = vmatpush.msra.mxu0 0.0
        %289 = vmatpush.msra.mxu0 0.0
        %290 = vmatpush.msra.mxu0 0.0
        %291 = vmatpush.msra.mxu0 0.0
        %292 = vmatpush.msra.mxu0 0.0
        %293 = vmatpush.msra.mxu0 0.0
        %294 = vmatpush.msra.mxu0 0.0
        %295 = vmatpush.msra.mxu0 0.0
        %296 = vmatpush.msra.mxu0 %v238
        %297 = vmatpush.msra.mxu0 %v234
        %298 = vmatpush.msra.mxu0 %v230
        %299 = vmatpush.msra.mxu0 %v226
        %300 = vmatmul.f32.gmra.mxu0 %v242
        %v301 = vpop.f32.mrf.mxu0
        %v302 = vadd.f32 0.0, %v301
        %303 = vdwg.mxu0
        %304 = vmatpush.msra.mxu0 0.0
        %305 = vmatpush.msra.mxu0 0.0
        %306 = vmatpush.msra.mxu0 0.0
        %307 = vmatpush.msra.mxu0 0.0
        %308 = vmatpush.msra.mxu0 0.0
        %309 = vmatpush.msra.mxu0 0.0
        %310 = vmatpush.msra.mxu0 0.0
        %311 = vmatpush.msra.mxu0 0.0
        %312 = vmatpush.msra.mxu0 0.0
        %313 = vmatpush.msra.mxu0 0.0
        %314 = vmatpush.msra.mxu0 0.0
        %315 = vmatpush.msra.mxu0 0.0
        %316 = vmatpush.msra.mxu0 %v239
        %317 = vmatpush.msra.mxu0 %v235
        %318 = vmatpush.msra.mxu0 %v231
        %319 = vmatpush.msra.mxu0 %v227
        %320 = vmatmul.f32.gmra.mxu0 %v242
        %v321 = vpop.f32.mrf.mxu0
        %v322 = vadd.f32 0.0, %v321
        %323 = vdwg.mxu0
        %v324 = vadd.f32 %v262, %v282
        %v325 = vadd.f32 %v324, %v302
        %v326 = vadd.f32 %v325, %v322
        %327 = vadd.xlane.f32.xlu0 %v326
        %v328 = vpop.xlane.xlu0 %327
        %v329 = vmul.f32 %v328, 0.001953125
        %v330 = vsub.f32 %v262, %v329
        %v331 = vsub.f32 %v282, %v329
        %v332 = vsub.f32 %v302, %v329
        %v333 = vsub.f32 %v322, %v329
        %v334 = vmul.f32 %v330, %v330
        %v335 = vmul.f32 %v331, %v331
        %v336 = vmul.f32 %v332, %v332
        %v337 = vmul.f32 %v333, %v333
        %v338 = vadd.f32 %v334, %v335
        %v339 = vadd.f32 %v338, %v336
        %v340 = vadd.f32 %v339, %v337
        %341 = vadd.xlane.f32.xlu0 %v340
        %v342 = vpop.xlane.xlu0 %341
        %v343 = vmul.f32 %v342, 0.001953125
        %v344 = vadd.f32 %v343, 1e-05
        %v345 = vrsqrt.pop %v344
        %v346 = vmul.f32 %v345, %v344
        %v347 = vmul.f32 %v346, %v345
        %v348 = vmul.f32 0.5, %v347
        %v349 = vsub.f32 1.5, %v348
        %v350 = vmul.f32 %v345, %v349
        %vm351 = vweird.f32 %v344
        %vm352 = vweird.f32 %v345
        %vm353 = vmor %vm351, %vm352
        %v354 = vsel %vm353, %v345, %v350
        %v355 = vmul.f32 %v330, %v354
        %v356 = vmul.f32 %v331, %v354
        %v357 = vmul.f32 %v332, %v354
        %v358 = vmul.f32 %v333, %v354
        %v359 = vmax.f32 %v355, 0.0
        %v360 = vmax.f32 %v356, 0.0
        %v361 = vmax.f32 %v357, 0.0
        %v362 = vmax.f32 %v358, 0.0
        %vm363 = vcmask 64512
        %v365 = vsel %vm363, %v219, 0
        %367 = vmatpush.msra.mxu0 0.0
        %368 = vmatpush.msra.mxu0 0.0
        %369 = vmatpush.msra.mxu0 0.0
        %370 = vmatpush.msra.mxu0 0.0
        %371 = vmatpush.msra.mxu0 0.0
        %372 = vmatpush.msra.mxu0 0.0
        %373 = vmatpush.msra.mxu0 0.0
        %374 = vmatpush.msra.mxu0 0.0
        %375 = vmatpush.msra.mxu0 0.0
        %376 = vmatpush.msra.mxu0 0.0
        %377 = vmatpush.msra.mxu0 0.0
        %378 = vmatpush.msra.mxu0 0.0
        %379 = vmatpush.msra.mxu0 0.0
        %380 = vmatpush.msra.mxu0 0.0
        %381 = vmatpush.msra.mxu0 0.0
        %382 = vmatpush.msra.mxu0 %v359
        %383 = vmatmul.f32.gmra.mxu0 %v365
        %v384 = vpop.f32.mrf.mxu0
        %v385 = vadd.f32 0.0, %v384
        %386 = vdwg.mxu0
        %387 = vmatpush.msra.mxu0 0.0
        %388 = vmatpush.msra.mxu0 0.0
        %389 = vmatpush.msra.mxu0 0.0
        %390 = vmatpush.msra.mxu0 0.0
        %391 = vmatpush.msra.mxu0 0.0
        %392 = vmatpush.msra.mxu0 0.0
        %393 = vmatpush.msra.mxu0 0.0
        %394 = vmatpush.msra.mxu0 0.0
        %395 = vmatpush.msra.mxu0 0.0
        %396 = vmatpush.msra.mxu0 0.0
        %397 = vmatpush.msra.mxu0 0.0
        %398 = vmatpush.msra.mxu0 0.0
        %399 = vmatpush.msra.mxu0 0.0
        %400 = vmatpush.msra.mxu0 0.0
        %401 = vmatpush.msra.mxu0 0.0
        %402 = vmatpush.msra.mxu0 %v360
        %403 = vmatmul.f32.gmra.mxu0 %v365
        %v404 = vpop.f32.mrf.mxu0
        %v405 = vadd.f32 0.0, %v404
        %406 = vdwg.mxu0
        %407 = vmatpush.msra.mxu0 0.0
        %408 = vmatpush.msra.mxu0 0.0
        %409 = vmatpush.msra.mxu0 0.0
        %410 = vmatpush.msra.mxu0 0.0
        %411 = vmatpush.msra.mxu0 0.0
        %412 = vmatpush.msra.mxu0 0.0
        %413 = vmatpush.msra.mxu0 0.0
        %414 = vmatpush.msra.mxu0 0.0
        %415 = vmatpush.msra.mxu0 0.0
        %416 = vmatpush.msra.mxu0 0.0
        %417 = vmatpush.msra.mxu0 0.0
        %418 = vmatpush.msra.mxu0 0.0
        %419 = vmatpush.msra.mxu0 0.0
        %420 = vmatpush.msra.mxu0 0.0
        %421 = vmatpush.msra.mxu0 0.0
        %422 = vmatpush.msra.mxu0 %v361
        %423 = vmatmul.f32.gmra.mxu0 %v365
        %v424 = vpop.f32.mrf.mxu0
        %v425 = vadd.f32 0.0, %v424
        %426 = vdwg.mxu0
        %427 = vmatpush.msra.mxu0 0.0
        %428 = vmatpush.msra.mxu0 0.0
        %429 = vmatpush.msra.mxu0 0.0
        %430 = vmatpush.msra.mxu0 0.0
        %431 = vmatpush.msra.mxu0 0.0
        %432 = vmatpush.msra.mxu0 0.0
        %433 = vmatpush.msra.mxu0 0.0
        %434 = vmatpush.msra.mxu0 0.0
        %435 = vmatpush.msra.mxu0 0.0
        %436 = vmatpush.msra.mxu0 0.0
        %437 = vmatpush.msra.mxu0 0.0
        %438 = vmatpush.msra.mxu0 0.0
        %439 = vmatpush.msra.mxu0 0.0
        %440 = vmatpush.msra.mxu0 0.0
        %441 = vmatpush.msra.mxu0 0.0
        %442 = vmatpush.msra.mxu0 %v362
        %443 = vmatmul.f32.gmra.mxu0 %v365
        %v444 = vpop.f32.mrf.mxu0
        %v445 = vadd.f32 0.0, %v444
        %446 = vdwg.mxu0
        %v447 = vadd.f32 %v385, %v405
        %v448 = vadd.f32 %v447, %v425
        %v449 = vadd.f32 %v448, %v445
        %450 = vadd.xlane.f32.xlu0 %v449
        %v451 = vpop.xlane.xlu0 %450
        %v452 = vmul.f32 %v451, 0.001953125
        %v453 = vsub.f32 %v385, %v452
        %v454 = vsub.f32 %v405, %v452
        %v455 = vsub.f32 %v425, %v452
        %v456 = vsub.f32 %v445, %v452
        %v457 = vmul.f32 %v453, %v453
        %v458 = vmul.f32 %v454, %v454
        %v459 = vmul.f32 %v455, %v455
        %v460 = vmul.f32 %v456, %v456
        %v461 = vadd.f32 %v457, %v458
        %v462 = vadd.f32 %v461, %v459
        %v463 = vadd.f32 %v462, %v460
        %464 = vadd.xlane.f32.xlu0 %v463
        %v465 = vpop.xlane.xlu0 %464
        %v466 = vmul.f32 %v465, 0.001953125
        %v467 = vadd.f32 %v466, 1e-05
        %v468 = vrsqrt.pop %v467
        %v469 = vmul.f32 %v468, %v467
        %v470 = vmul.f32 %v469, %v468
        %v471 = vmul.f32 0.5, %v470
        %v472 = vsub.f32 1.5, %v471
        %v473 = vmul.f32 %v468, %v472
        %vm474 = vweird.f32 %v467
        %vm475 = vweird.f32 %v468
        %vm476 = vmor %vm474, %vm475
        %v477 = vsel %vm476, %v468, %v473
        %v478 = vmul.f32 %v453, %v477
        %v479 = vmul.f32 %v454, %v477
        %v480 = vmul.f32 %v455, %v477
        %v481 = vmul.f32 %v456, %v477
        %v482 = vmax.f32 %v478, 0.0
        %v483 = vmax.f32 %v479, 0.0
        %v484 = vmax.f32 %v480, 0.0
        %v485 = vmax.f32 %v481, 0.0
        %v487 = vsel %vm363, %v220, 0
        %v490 = vsel %vm363, %v221, 0
        %v493 = vsel %vm363, %v222, 0
        %v496 = vsel %vm363, %v223, 0
        %498 = vmatpush.msra.mxu0 0.0
        %499 = vmatpush.msra.mxu0 0.0
        %500 = vmatpush.msra.mxu0 0.0
        %501 = vmatpush.msra.mxu0 0.0
        %502 = vmatpush.msra.mxu0 0.0
        %503 = vmatpush.msra.mxu0 0.0
        %504 = vmatpush.msra.mxu0 0.0
        %505 = vmatpush.msra.mxu0 0.0
        %506 = vmatpush.msra.mxu0 0.0
        %507 = vmatpush.msra.mxu0 0.0
        %508 = vmatpush.msra.mxu0 0.0
        %509 = vmatpush.msra.mxu0 0.0
        %510 = vmatpush.msra.mxu0 0.0
        %511 = vmatpush.msra.mxu0 0.0
        %512 = vmatpush.msra.mxu0 0.0
        %513 = vmatpush.msra.mxu0 %v482
        %514 = vmatmul.f32.gmra.mxu0 %v487
        %v515 = vpop.f32.mrf.mxu0
        %v516 = vadd.f32 0.0, %v515
        %517 = vmatmul.f32.gmra.mxu0 %v490
        %v518 = vpop.f32.mrf.mxu0
        %v519 = vadd.f32 0.0, %v518
        %520 = vmatmul.f32.gmra.mxu0 %v493
        %v521 = vpop.f32.mrf.mxu0
        %v522 = vadd.f32 0.0, %v521
        %523 = vmatmul.f32.gmra.mxu0 %v496
        %v524 = vpop.f32.mrf.mxu0
        %v525 = vadd.f32 0.0, %v524
        %526 = vdwg.mxu0
        %527 = vmatpush.msra.mxu0 0.0
        %528 = vmatpush.msra.mxu0 0.0
        %529 = vmatpush.msra.mxu0 0.0
        %530 = vmatpush.msra.mxu0 0.0
        %531 = vmatpush.msra.mxu0 0.0
        %532 = vmatpush.msra.mxu0 0.0
        %533 = vmatpush.msra.mxu0 0.0
        %534 = vmatpush.msra.mxu0 0.0
        %535 = vmatpush.msra.mxu0 0.0
        %536 = vmatpush.msra.mxu0 0.0
        %537 = vmatpush.msra.mxu0 0.0
        %538 = vmatpush.msra.mxu0 0.0
        %539 = vmatpush.msra.mxu0 0.0
        %540 = vmatpush.msra.mxu0 0.0
        %541 = vmatpush.msra.mxu0 0.0
        %542 = vmatpush.msra.mxu0 %v483
        %543 = vmatmul.f32.gmra.mxu0 %v487
        %v544 = vpop.f32.mrf.mxu0
        %v545 = vadd.f32 0.0, %v544
        %546 = vmatmul.f32.gmra.mxu0 %v490
        %v547 = vpop.f32.mrf.mxu0
        %v548 = vadd.f32 0.0, %v547
        %549 = vmatmul.f32.gmra.mxu0 %v493
        %v550 = vpop.f32.mrf.mxu0
        %v551 = vadd.f32 0.0, %v550
        %552 = vmatmul.f32.gmra.mxu0 %v496
        %v553 = vpop.f32.mrf.mxu0
        %v554 = vadd.f32 0.0, %v553
        %555 = vdwg.mxu0
        %556 = vmatpush.msra.mxu0 0.0
        %557 = vmatpush.msra.mxu0 0.0
        %558 = vmatpush.msra.mxu0 0.0
        %559 = vmatpush.msra.mxu0 0.0
        %560 = vmatpush.msra.mxu0 0.0
        %561 = vmatpush.msra.mxu0 0.0
        %562 = vmatpush.msra.mxu0 0.0
        %563 = vmatpush.msra.mxu0 0.0
        %564 = vmatpush.msra.mxu0 0.0
        %565 = vmatpush.msra.mxu0 0.0
        %566 = vmatpush.msra.mxu0 0.0
        %567 = vmatpush.msra.mxu0 0.0
        %568 = vmatpush.msra.mxu0 0.0
        %569 = vmatpush.msra.mxu0 0.0
        %570 = vmatpush.msra.mxu0 0.0
        %571 = vmatpush.msra.mxu0 %v484
        %572 = vmatmul.f32.gmra.mxu0 %v487
        %v573 = vpop.f32.mrf.mxu0
        %v574 = vadd.f32 0.0, %v573
        %575 = vmatmul.f32.gmra.mxu0 %v490
        %v576 = vpop.f32.mrf.mxu0
        %v577 = vadd.f32 0.0, %v576
        %578 = vmatmul.f32.gmra.mxu0 %v493
        %v579 = vpop.f32.mrf.mxu0
        %v580 = vadd.f32 0.0, %v579
        %581 = vmatmul.f32.gmra.mxu0 %v496
        %v582 = vpop.f32.mrf.mxu0
        %v583 = vadd.f32 0.0, %v582
        %584 = vdwg.mxu0
        %585 = vmatpush.msra.mxu0 0.0
        %586 = vmatpush.msra.mxu0 0.0
        %587 = vmatpush.msra.mxu0 0.0
        %588 = vmatpush.msra.mxu0 0.0
        %589 = vmatpush.msra.mxu0 0.0
        %590 = vmatpush.msra.mxu0 0.0
        %591 = vmatpush.msra.mxu0 0.0
        %592 = vmatpush.msra.mxu0 0.0
        %593 = vmatpush.msra.mxu0 0.0
        %594 = vmatpush.msra.mxu0 0.0
        %595 = vmatpush.msra.mxu0 0.0
        %596 = vmatpush.msra.mxu0 0.0
        %597 = vmatpush.msra.mxu0 0.0
        %598 = vmatpush.msra.mxu0 0.0
        %599 = vmatpush.msra.mxu0 0.0
        %600 = vmatpush.msra.mxu0 %v485
        %601 = vmatmul.f32.gmra.mxu0 %v487
        %v602 = vpop.f32.mrf.mxu0
        %v603 = vadd.f32 0.0, %v602
        %604 = vmatmul.f32.gmra.mxu0 %v490
        %v605 = vpop.f32.mrf.mxu0
        %v606 = vadd.f32 0.0, %v605
        %607 = vmatmul.f32.gmra.mxu0 %v493
        %v608 = vpop.f32.mrf.mxu0
        %v609 = vadd.f32 0.0, %v608
        %610 = vmatmul.f32.gmra.mxu0 %v496
        %v611 = vpop.f32.mrf.mxu0
        %v612 = vadd.f32 0.0, %v611
        %613 = vdwg.mxu0
        %v614 = vadd.f32 %v516, %v545
        %v615 = vadd.f32 %v614, %v574
        %v616 = vadd.f32 %v615, %v603
        %617 = vadd.xlane.f32.xlu0 %v616
        %v618 = vpop.xlane.xlu0 %617
        %v619 = vadd.f32 %v519, %v548
        %v620 = vadd.f32 %v619, %v577
        %v621 = vadd.f32 %v620, %v606
        %622 = vadd.xlane.f32.xlu0 %v621
        %v623 = vpop.xlane.xlu0 %622
        %v624 = vadd.f32 %v522, %v551
        %v625 = vadd.f32 %v624, %v580
        %v626 = vadd.f32 %v625, %v609
        %627 = vadd.xlane.f32.xlu0 %v626
        %v628 = vpop.xlane.xlu0 %627
        %v629 = vadd.f32 %v525, %v554
        %v630 = vadd.f32 %v629, %v583
        %v631 = vadd.f32 %v630, %v612
        %632 = vadd.xlane.f32.xlu0 %v631
        %v633 = vpop.xlane.xlu0 %632
        %v634 = vmul.f32 %v618, 0.001953125
        %v635 = vmul.f32 %v623, 0.001953125
        %v636 = vmul.f32 %v628, 0.001953125
        %v637 = vmul.f32 %v633, 0.001953125
        %v638 = vsub.f32 %v516, %v634
        %v639 = vsub.f32 %v545, %v634
        %v640 = vsub.f32 %v574, %v634
        %v641 = vsub.f32 %v603, %v634
        %v642 = vsub.f32 %v519, %v635
        %v643 = vsub.f32 %v548, %v635
        %v644 = vsub.f32 %v577, %v635
        %v645 = vsub.f32 %v606, %v635
        %v646 = vsub.f32 %v522, %v636
        %v647 = vsub.f32 %v551, %v636
        %v648 = vsub.f32 %v580, %v636
        %v649 = vsub.f32 %v609, %v636
        %v650 = vsub.f32 %v525, %v637
        %v651 = vsub.f32 %v554, %v637
        %v652 = vsub.f32 %v583, %v637
        %v653 = vsub.f32 %v612, %v637
        %v654 = vmul.f32 %v638, %v638
        %v655 = vmul.f32 %v639, %v639
        %v656 = vmul.f32 %v640, %v640
        %v657 = vmul.f32 %v641, %v641
        %v658 = vmul.f32 %v642, %v642
        %v659 = vmul.f32 %v643, %v643
        %v660 = vmul.f32 %v644, %v644
        %v661 = vmul.f32 %v645, %v645
        %v662 = vmul.f32 %v646, %v646
        %v663 = vmul.f32 %v647, %v647
        %v664 = vmul.f32 %v648, %v648
        %v665 = vmul.f32 %v649, %v649
        %v666 = vmul.f32 %v650, %v650
        %v667 = vmul.f32 %v651, %v651
        %v668 = vmul.f32 %v652, %v652
        %v669 = vmul.f32 %v653, %v653
        %v670 = vadd.f32 %v654, %v655
        %v671 = vadd.f32 %v670, %v656
        %v672 = vadd.f32 %v671, %v657
        %673 = vadd.xlane.f32.xlu0 %v672
        %v674 = vpop.xlane.xlu0 %673
        %v675 = vadd.f32 %v658, %v659
        %v676 = vadd.f32 %v675, %v660
        %v677 = vadd.f32 %v676, %v661
        %678 = vadd.xlane.f32.xlu0 %v677
        %v679 = vpop.xlane.xlu0 %678
        %v680 = vadd.f32 %v662, %v663
        %v681 = vadd.f32 %v680, %v664
        %v682 = vadd.f32 %v681, %v665
        %683 = vadd.xlane.f32.xlu0 %v682
        %v684 = vpop.xlane.xlu0 %683
        %v685 = vadd.f32 %v666, %v667
        %v686 = vadd.f32 %v685, %v668
        %v687 = vadd.f32 %v686, %v669
        %688 = vadd.xlane.f32.xlu0 %v687
        %v689 = vpop.xlane.xlu0 %688
        %v690 = vmul.f32 %v674, 0.001953125
        %v691 = vmul.f32 %v679, 0.001953125
        %v692 = vmul.f32 %v684, 0.001953125
        %v693 = vmul.f32 %v689, 0.001953125
        %v694 = vadd.f32 %v690, 1e-05
        %v695 = vadd.f32 %v691, 1e-05
        %v696 = vadd.f32 %v692, 1e-05
        %v697 = vadd.f32 %v693, 1e-05
        %v698 = vrsqrt.pop %v694
        %v699 = vmul.f32 %v698, %v694
        %v700 = vmul.f32 %v699, %v698
        %v701 = vmul.f32 0.5, %v700
        %v702 = vsub.f32 1.5, %v701
        %v703 = vmul.f32 %v698, %v702
        %vm704 = vweird.f32 %v694
        %vm705 = vweird.f32 %v698
        %vm706 = vmor %vm704, %vm705
        %v707 = vsel %vm706, %v698, %v703
        %v708 = vrsqrt.pop %v695
        %v709 = vmul.f32 %v708, %v695
        %v710 = vmul.f32 %v709, %v708
        %v711 = vmul.f32 0.5, %v710
        %v712 = vsub.f32 1.5, %v711
        %v713 = vmul.f32 %v708, %v712
        %vm714 = vweird.f32 %v695
        %vm715 = vweird.f32 %v708
        %vm716 = vmor %vm714, %vm715
        %v717 = vsel %vm716, %v708, %v713
        %v718 = vrsqrt.pop %v696
        %v719 = vmul.f32 %v718, %v696
        %v720 = vmul.f32 %v719, %v718
        %v721 = vmul.f32 0.5, %v720
        %v722 = vsub.f32 1.5, %v721
        %v723 = vmul.f32 %v718, %v722
        %vm724 = vweird.f32 %v696
        %vm725 = vweird.f32 %v718
        %vm726 = vmor %vm724, %vm725
        %v727 = vsel %vm726, %v718, %v723
        %v728 = vrsqrt.pop %v697
        %v729 = vmul.f32 %v728, %v697
        %v730 = vmul.f32 %v729, %v728
        %v731 = vmul.f32 0.5, %v730
        %v732 = vsub.f32 1.5, %v731
        %v733 = vmul.f32 %v728, %v732
        %vm734 = vweird.f32 %v697
        %vm735 = vweird.f32 %v728
        %vm736 = vmor %vm734, %vm735
        %v737 = vsel %vm736, %v728, %v733
        %v738 = vmul.f32 %v638, %v707
        %v739 = vmul.f32 %v639, %v707
        %v740 = vmul.f32 %v640, %v707
        %v741 = vmul.f32 %v641, %v707
        %v742 = vmul.f32 %v642, %v717
        %v743 = vmul.f32 %v643, %v717
        %v744 = vmul.f32 %v644, %v717
        %v745 = vmul.f32 %v645, %v717
        %v746 = vmul.f32 %v646, %v727
        %v747 = vmul.f32 %v647, %v727
        %v748 = vmul.f32 %v648, %v727
        %v749 = vmul.f32 %v649, %v727
        %v750 = vmul.f32 %v650, %v737
        %v751 = vmul.f32 %v651, %v737
        %v752 = vmul.f32 %v652, %v737
        %v753 = vmul.f32 %v653, %v737
        %v754 = vadd.f32 %v738, %v224
        %v755 = vadd.f32 %v739, %v225
        %v756 = vadd.f32 %v740, %v226
        %v757 = vadd.f32 %v741, %v227
        %v758 = vadd.f32 %v742, %v228
        %v759 = vadd.f32 %v743, %v229
        %v760 = vadd.f32 %v744, %v230
        %v761 = vadd.f32 %v745, %v231
        %v762 = vadd.f32 %v746, %v232
        %v763 = vadd.f32 %v747, %v233
        %v764 = vadd.f32 %v748, %v234
        %v765 = vadd.f32 %v749, %v235
        %v766 = vadd.f32 %v750, %v236
        %v767 = vadd.f32 %v751, %v237
        %v768 = vadd.f32 %v752, %v238
        %v769 = vadd.f32 %v753, %v239
        %v770 = vmax.f32 %v754, 0.0
        %v771 = vmax.f32 %v755, 0.0
        %v772 = vmax.f32 %v756, 0.0
        %v773 = vmax.f32 %v757, 0.0
        %v774 = vmax.f32 %v758, 0.0
        %v775 = vmax.f32 %v759, 0.0
        %v776 = vmax.f32 %v760, 0.0
        %v777 = vmax.f32 %v761, 0.0
        %v778 = vmax.f32 %v762, 0.0
        %v779 = vmax.f32 %v763, 0.0
        %v780 = vmax.f32 %v764, 0.0
        %v781 = vmax.f32 %v765, 0.0
        %v782 = vmax.f32 %v766, 0.0
        %v783 = vmax.f32 %v767, 0.0
        %v784 = vmax.f32 %v768, 0.0
        %v785 = vmax.f32 %v769, 0.0
        %786 = vst [vmem:[%s217] sm:$0xff] %v770
        %787 = vst [vmem:[%s217 + $0x8] sm:$0xff] %v771
        %788 = vst [vmem:[%s217 + $0x10] sm:$0xff] %v772
        %789 = vst [vmem:[%s217 + $0x18] sm:$0xff] %v773
        %790 = vst [vmem:[%s217 + $0x20] sm:$0xff] %v774
        %791 = vst [vmem:[%s217 + $0x28] sm:$0xff] %v775
        %792 = vst [vmem:[%s217 + $0x30] sm:$0xff] %v776
        %793 = vst [vmem:[%s217 + $0x38] sm:$0xff] %v777
        %794 = vst [vmem:[%s217 + $0x40] sm:$0xff] %v778
        %795 = vst [vmem:[%s217 + $0x48] sm:$0xff] %v779
        %796 = vst [vmem:[%s217 + $0x50] sm:$0xff] %v780
        %797 = vst [vmem:[%s217 + $0x58] sm:$0xff] %v781
        %798 = vst [vmem:[%s217 + $0x60] sm:$0xff] %v782
        %799 = vst [vmem:[%s217 + $0x68] sm:$0xff] %v783
        %800 = vst [vmem:[%s217 + $0x70] sm:$0xff] %v784
        %801 = vst [vmem:[%s217 + $0x78] sm:$0xff] %v785
        %s802 = sand.u32 %s118, 1
        %s803 = scalar_lea.sflag [#allocation4], %s802
        %s804 = sand.u32 %s118, 1
        %s805 = smul.addr %s804, 128
        %s806 = scalar_lea.vmem [#allocation5], %s805
        // Predicated region
        $region41: #{tpu_custom_call.1} parent=35 // pred_check
          %p807 = pneg %p128
        $region42: #{tpu_custom_call.1} parent=35 // pred_check_branch
          %809 = sbr.rel (%p807) target = $region44
        $region43: #{tpu_custom_call.1} parent=35 // pred_region
          %811 = vsyncadd %s803, 0
          %s812 = smul.addr %s21, 16
          %s813 = smul.addr %s812, 8
          %s814 = scalar_lea.hbm %s4, %s813
          %s815 = sshll.u32 %s806, 4
          %s816 = int_to_ptr.vmem [resolvable:$true] %s815
          %s817 = sshll.u32 %s814, 4
          %s818 = int_to_ptr.hbm [resolvable:$true] %s817
          %823 = dma.vmem_to_hbm [thread:$0]  %s816, 2048, %s818, %s803, 512, 512, 32
        $region44: #{tpu_custom_call.1} parent=35 // pred_fallthru
          _
      $region36: #{tpu_custom_call.1} parent=5 // pred_fallthru
        _
      %p824 = scmp.le.s32.totalorder 2, %s16
      // Predicated region
      $region45: #{tpu_custom_call.1} parent=5 // pred_check
        %p825 = pneg %p824
      $region46: #{tpu_custom_call.1} parent=5 // pred_check_branch
        %827 = sbr.rel (%p825) target = $region48
      $region47: #{tpu_custom_call.1} parent=5 // pred_region
        %s828 = ssub.s32 %s16, 2
        // Predicated region
        $region49: #{tpu_custom_call.1} parent=47 // pred_check
          %p829 = pneg %p134
        $region50: #{tpu_custom_call.1} parent=47 // pred_check_branch
          %831 = sbr.rel (%p829) target = $region52
        $region51: #{tpu_custom_call.1} parent=47 // pred_region
          %s832 = sand.u32 %s119, 1
          %s833 = scalar_lea.sflag [#allocation4], %s832
          %s834 = sand.u32 %s119, 1
          %s835 = smul.addr %s834, 128
          %s836 = scalar_lea.vmem [#allocation5], %s835
          %838 = dma.done %s833, 2048
        $region52: #{tpu_custom_call.1} parent=47 // pred_fallthru
          _
      $region48: #{tpu_custom_call.1} parent=5 // pred_fallthru
        _
    $region6: #{tpu_custom_call.1} parent=1 // loop_footer
      %s20 = sadd.s32 1, %s16
    $region7: #{tpu_custom_call.1} parent=1 // loop_footer_branch
      %15 = sbr.rel target = $region3
    $region8: #{tpu_custom_call.1} parent=1 // loop_exit
      _
    %839 = vsyncpa [#allocation3], 1
    %s840 = scalar_lea.sflag [#allocation3], 1
    %841 = vsyncpa %s840, 1
    %842 = vsyncpa [#allocation4], 1
    %s843 = scalar_lea.sflag [#allocation4], 1
    %844 = vsyncpa %s843, 1

// kernel: tpu_custom_call.1
$region0: #{tpu_custom_call.1}
  #allocation0 [shape = 'u32[]', space=smem, size = 0x4, offset = 0x4, fixed_abs, tag = 'smem constant byte address 0x4 - core index']
  #allocation1 [shape = 'u32[72,128]{1,0:T(1,128)}', space=vmem, size = 0x9000, scoped, tag = 'internal scratch']
  %s0 = inlined_call_operand.hbm [shape: f32[2,32,512], index: 0, kind: input, shape index: {}]
  %s1 = inlined_call_operand.vmem [shape: f32[8,32], index: 1, kind: input, shape index: {}]
  %s2 = inlined_call_operand.vmem [shape: f32[8,8], index: 2, kind: input, shape index: {}]
  %s3 = inlined_call_operand.vmem [shape: f32[32,8], index: 3, kind: input, shape index: {}]
  %s4 = inlined_call_operand.hbm [shape: f32[2,32,512], index: 4, kind: output, shape index: {}]
  %s5 = sld [smem:[#allocation0]]
  $region53: #{tpu_custom_call.1} parent=0
    _
  %s7 = ssub.s32 1, %s5
  %s8 = scalar_select 0, %s7, %s5
  $region1: #{tpu_custom_call.1} parent=0
    #allocation2 [shape = 'u8[131072]{0}', space=vmem, size = 0x20000, scoped, tag = 'input window, operand 0']
    #allocation3 [shape = 's32[2]{0}', space=sflag, size = 0x8, scoped, tag = 'scoped memory for tpu_custom_call.1']
    #allocation4 [shape = 's32[2]{0}', space=sflag, size = 0x8, scoped, tag = 'scoped memory for tpu_custom_call.1']
    #allocation5 [shape = 'u8[131072]{0}', space=vmem, size = 0x20000, scoped, tag = 'output window, operand 0']
    %9 = vsyncpa [#allocation3], 0
    %s10 = scalar_lea.sflag [#allocation3], 1
    %11 = vsyncpa %s10, 0
    %12 = vsyncpa [#allocation4], 0
    %s13 = scalar_lea.sflag [#allocation4], 1
    %14 = vsyncpa %s13, 0
    loop: start=0, step=1, limit=4
    $region2: #{tpu_custom_call.1} parent=1 // loop_pre_header
      _
    $region3: #{tpu_custom_call.1} parent=1 // loop_header
      %s16 = sphi 0, %s20
      %p17 = scmp.ge.s32.totalorder %s16, 4
      %s26 = sphi 0, %s28
      %s29 = sphi 0, %s26
      %s30 = sphi 0, %s29
      %s46 = sphi 0, %s30
      %s50 = sphi 0, %s50
      %s52 = sphi 0, %s50
      %s53 = sphi 0, %s52
      %s67 = sphi 0, %s53
      %s71 = sphi 0, %s71
      %s73 = sphi 0, %s71
      %s74 = sphi 0, %s73
      %s88 = sphi 0, %s74
      %s92 = sphi 0, %s92
      %s94 = sphi 0, %s92
      %s95 = sphi 0, %s94
      %s109 = sphi 0, %s95
      %s115 = sphi 0, %s117
      %s118 = sphi 0, %s115
      %s119 = sphi 0, %s118
      %s135 = sphi 0, %s119
    $region4: #{tpu_custom_call.1} parent=1 // loop_header_branch
      %19 = sbr.rel (%p17) target = $region8
    $region5: #{tpu_custom_call.1} parent=1 // loop_body
      %s21 = ssub.s32 %s16, 1
      %s22 = ssub.s32 %s16, 2
      %s23 = sadd.s32 %s16, 1
      %s24 = ssub.s32 %s16, %s23
      %p25 = scmp.eq.s32.totalorder %s24, 0
      %s27 = sadd.s32 %s26, 1
      %s28 = scalar_select %p25, %s26, %s27
      %p31 = pneg %p25
      %p32 = scmp.eq.s32.totalorder %s16, 1
      %p33 = por %p31, %p32
      %p34 = scmp.ne.s32.totalorder %s26, %s29
      %p35 = scmp.eq.s32.totalorder %s16, 0
      %p36 = por %p34, %p35
      %p37 = scmp.ne.s32.totalorder %s26, %s29
      %p38 = scmp.eq.s32.totalorder %s21, 1
      %p39 = por %p37, %p38
      %p40 = scmp.ne.s32.totalorder %s29, %s30
      %p41 = scmp.eq.s32.totalorder %s21, 0
      %p42 = por %p40, %p41
      %p43 = scmp.ne.s32.totalorder %s29, %s30
      %p44 = scmp.eq.s32.totalorder %s22, 1
      %p45 = por %p43, %p44
      %p47 = scmp.ne.s32.totalorder %s30, %s46
      %p48 = scmp.eq.s32.totalorder %s22, 0
      %p49 = por %p47, %p48
      %s51 = sadd.s32 %s50, 1
      %p54 = scmp.eq.s32.totalorder %s16, 1
      %p55 = scmp.ne.s32.totalorder %s50, %s52
      %p56 = scmp.eq.s32.totalorder %s16, 0
      %p57 = por %p55, %p56
      %p58 = scmp.ne.s32.totalorder %s50, %s52
      %p59 = scmp.eq.s32.totalorder %s21, 1
      %p60 = por %p58, %p59
      %p61 = scmp.ne.s32.totalorder %s52, %s53
      %p62 = scmp.eq.s32.totalorder %s21, 0
      %p63 = por %p61, %p62
      %p64 = scmp.ne.s32.totalorder %s52, %s53
      %p65 = scmp.eq.s32.totalorder %s22, 1
      %p66 = por %p64, %p65
      %p68 = scmp.ne.s32.totalorder %s53, %s67
      %p69 = scmp.eq.s32.totalorder %s22, 0
      %p70 = por %p68, %p69
      %s72 = sadd.s32 %s71, 1
      %p75 = scmp.eq.s32.totalorder %s16, 1
      %p76 = scmp.ne.s32.totalorder %s71, %s73
      %p77 = scmp.eq.s32.totalorder %s16, 0
      %p78 = por %p76, %p77
      %p79 = scmp.ne.s32.totalorder %s71, %s73
      %p80 = scmp.eq.s32.totalorder %s21, 1
      %p81 = por %p79, %p80
      %p82 = scmp.ne.s32.totalorder %s73, %s74
      %p83 = scmp.eq.s32.totalorder %s21, 0
      %p84 = por %p82, %p83
      %p85 = scmp.ne.s32.totalorder %s73, %s74
      %p86 = scmp.eq.s32.totalorder %s22, 1
      %p87 = por %p85, %p86
      %p89 = scmp.ne.s32.totalorder %s74, %s88
      %p90 = scmp.eq.s32.totalorder %s22, 0
      %p91 = por %p89, %p90
      %s93 = sadd.s32 %s92, 1
      %p96 = scmp.eq.s32.totalorder %s16, 1
      %p97 = scmp.ne.s32.totalorder %s92, %s94
      %p98 = scmp.eq.s32.totalorder %s16, 0
      %p99 = por %p97, %p98
      %p100 = scmp.ne.s32.totalorder %s92, %s94
      %p101 = scmp.eq.s32.totalorder %s21, 1
      %p102 = por %p100, %p101
      %p103 = scmp.ne.s32.totalorder %s94, %s95
      %p104 = scmp.eq.s32.totalorder %s21, 0
      %p105 = por %p103, %p104
      %p106 = scmp.ne.s32.totalorder %s94, %s95
      %p107 = scmp.eq.s32.totalorder %s22, 1
      %p108 = por %p106, %p107
      %p110 = scmp.ne.s32.totalorder %s95, %s109
      %p111 = scmp.eq.s32.totalorder %s22, 0
      %p112 = por %p110, %p111
      %s113 = ssub.s32 %s16, %s23
      %p114 = scmp.eq.s32.totalorder %s113, 0
      %s116 = sadd.s32 %s115, 1
      %s117 = scalar_select %p114, %s115, %s116
      %p120 = pneg %p114
      %p121 = scmp.eq.s32.totalorder %s16, 1
      %p122 = por %p120, %p121
      %p123 = scmp.ne.s32.totalorder %s115, %s118
      %p124 = scmp.eq.s32.totalorder %s16, 0
      %p125 = por %p123, %p124
      %p126 = scmp.ne.s32.totalorder %s115, %s118
      %p127 = scmp.eq.s32.totalorder %s21, 1
      %p128 = por %p126, %p127
      %p129 = scmp.ne.s32.totalorder %s118, %s119
      %p130 = scmp.eq.s32.totalorder %s21, 0
      %p131 = por %p129, %p130
      %p132 = scmp.ne.s32.totalorder %s118, %s119
      %p133 = scmp.eq.s32.totalorder %s22, 1
      %p134 = por %p132, %p133
      %p136 = scmp.ne.s32.totalorder %s119, %s135
      %p137 = scmp.eq.s32.totalorder %s22, 0
      %p138 = por %p136, %p137
      %p139 = scmp.le.s32.totalorder 1, %s16
      %p140 = scmp.lt.s32.totalorder %s16, 3
      %p141 = pnand %p139, %p140
      %p142 = pneg %p141
      // Predicated region
      $region9: #{tpu_custom_call.1} parent=5 // pred_check
        _
      $region10: #{tpu_custom_call.1} parent=5 // pred_check_branch
        %144 = sbr.rel (%p141) target = $region12
      $region11: #{tpu_custom_call.1} parent=5 // pred_region
        %s145 = ssub.s32 %s16, 1
        // Predicated region
        $region13: #{tpu_custom_call.1} parent=11 // pred_check
          %p146 = pneg %p63
        $region14: #{tpu_custom_call.1} parent=11 // pred_check_branch
          %148 = sbr.rel (%p146) target = $region16
        $region15: #{tpu_custom_call.1} parent=11 // pred_region
          _
        $region16: #{tpu_custom_call.1} parent=11 // pred_fallthru
          _
        // Predicated region
        $region17: #{tpu_custom_call.1} parent=11 // pred_check
          %p149 = pneg %p84
        $region18: #{tpu_custom_call.1} parent=11 // pred_check_branch
          %151 = sbr.rel (%p149) target = $region20
        $region19: #{tpu_custom_call.1} parent=11 // pred_region
          _
        $region20: #{tpu_custom_call.1} parent=11 // pred_fallthru
          _
        // Predicated region
        $region21: #{tpu_custom_call.1} parent=11 // pred_check
          %p152 = pneg %p105
        $region22: #{tpu_custom_call.1} parent=11 // pred_check_branch
          %154 = sbr.rel (%p152) target = $region24
        $region23: #{tpu_custom_call.1} parent=11 // pred_region
          _
        $region24: #{tpu_custom_call.1} parent=11 // pred_fallthru
          _
      $region12: #{tpu_custom_call.1} parent=5 // pred_fallthru
        _
      %p155 = scmp.lt.s32.totalorder %s16, 2
      // Predicated region
      $region25: #{tpu_custom_call.1} parent=5 // pred_check
        %p156 = pneg %p155
      $region26: #{tpu_custom_call.1} parent=5 // pred_check_branch
        %158 = sbr.rel (%p156) target = $region28
      $region27: #{tpu_custom_call.1} parent=5 // pred_region
        // Predicated region
        $region29: #{tpu_custom_call.1} parent=27 // pred_check
          %p159 = pneg %p36
        $region30: #{tpu_custom_call.1} parent=27 // pred_check_branch
          %161 = sbr.rel (%p159) target = $region32
        $region31: #{tpu_custom_call.1} parent=27 // pred_region
          %s162 = sand.u32 %s26, 1
          %s163 = scalar_lea.sflag [#allocation3], %s162
          %s164 = sand.u32 %s26, 1
          %s165 = smul.addr %s164, 128
          %s166 = scalar_lea.vmem [#allocation2], %s165
          %168 = vsyncadd %s163, 0
          %s169 = smul.addr %s16, 16
          %s170 = smul.addr %s169, 8
          %s171 = scalar_lea.hbm %s0, %s170
          %s172 = sshll.u32 %s171, 4
          %s173 = int_to_ptr.hbm [resolvable:$true] %s172
          %s174 = sshll.u32 %s166, 4
          %s175 = int_to_ptr.vmem [resolvable:$true] %s174
          %180 = dma.hbm_to_vmem [thread:$0]  %s173, 2048, %s175, %s163, 512, 512, 32
        $region32: #{tpu_custom_call.1} parent=27 // pred_fallthru
          _
      $region28: #{tpu_custom_call.1} parent=5 // pred_fallthru
        _
      %p181 = scmp.le.s32.totalorder 1, %s16
      %p182 = scmp.lt.s32.totalorder %s16, 3
      %p183 = pnand %p181, %p182
      %p184 = pneg %p183
      // Predicated region
      $region33: #{tpu_custom_call.1} parent=5 // pred_check
        _
      $region34: #{tpu_custom_call.1} parent=5 // pred_check_branch
        %186 = sbr.rel (%p183) target = $region36
      $region35: #{tpu_custom_call.1} parent=5 // pred_region
        %s187 = ssub.s32 %s16, 1
        %s188 = sand.u32 %s29, 1
        %s189 = scalar_lea.sflag [#allocation3], %s188
        %s190 = sand.u32 %s29, 1
        %s191 = smul.addr %s190, 128
        %s192 = scalar_lea.vmem [#allocation2], %s191
        // Predicated region
        $region37: #{tpu_custom_call.1} parent=35 // pred_check
          %p193 = pneg %p42
        $region38: #{tpu_custom_call.1} parent=35 // pred_check_branch
          %195 = sbr.rel (%p193) target = $region40
        $region39: #{tpu_custom_call.1} parent=35 // pred_region
          %197 = dma.done %s189, 2048
        $region40: #{tpu_custom_call.1} parent=35 // pred_fallthru
          _
        %s198 = sand.u32 %s29, 1
        %s199 = scalar_lea.sflag [#allocation3], %s198
        %s200 = sand.u32 %s29, 1
        %s201 = smul.addr %s200, 128
        %s202 = scalar_lea.vmem [#allocation2], %s201
        %p203 = pneg %p42
        %p204 = pneg %p39
        %p205 = pneg %p63
        %p206 = pneg %p60
        %p207 = pneg %p84
        %p208 = pneg %p81
        %p209 = pneg %p105
        %p210 = pneg %p102
        %p211 = pneg %p131
        %p212 = pneg %p128
        %s213 = sand.u32 %s118, 1
        %s214 = scalar_lea.sflag [#allocation4], %s213
        %s215 = sand.u32 %s118, 1
        %s216 = smul.addr %s215, 128
        %s217 = scalar_lea.vmem [#allocation5], %s216
        %v218 = vld [vmem:[%s1] sm:$0xff]
        %v219 = vld [vmem:[%s2] sm:$0xff]
        %v220 = vld [vmem:[%s3] sm:$0xff]
        %v221 = vld [vmem:[%s3 + $0x8] sm:$0xff]
        %v222 = vld [vmem:[%s3 + $0x10] sm:$0xff]
        %v223 = vld [vmem:[%s3 + $0x18] sm:$0xff]
        %v224 = vld [vmem:[%s192] sm:$0xff]
        %v225 = vld [vmem:[%s192 + $0x8] sm:$0xff]
        %v226 = vld [vmem:[%s192 + $0x10] sm:$0xff]
        %v227 = vld [vmem:[%s192 + $0x18] sm:$0xff]
        %v228 = vld [vmem:[%s192 + $0x20] sm:$0xff]
        %v229 = vld [vmem:[%s192 + $0x28] sm:$0xff]
        %v230 = vld [vmem:[%s192 + $0x30] sm:$0xff]
        %v231 = vld [vmem:[%s192 + $0x38] sm:$0xff]
        %v232 = vld [vmem:[%s192 + $0x40] sm:$0xff]
        %v233 = vld [vmem:[%s192 + $0x48] sm:$0xff]
        %v234 = vld [vmem:[%s192 + $0x50] sm:$0xff]
        %v235 = vld [vmem:[%s192 + $0x58] sm:$0xff]
        %v236 = vld [vmem:[%s192 + $0x60] sm:$0xff]
        %v237 = vld [vmem:[%s192 + $0x68] sm:$0xff]
        %v238 = vld [vmem:[%s192 + $0x70] sm:$0xff]
        %v239 = vld [vmem:[%s192 + $0x78] sm:$0xff]
        %vm240 = vcmask 261120
        %v242 = vsel %vm240, %v218, 0
        %244 = vmatpush.msra.mxu0 0.0
        %245 = vmatpush.msra.mxu0 0.0
        %246 = vmatpush.msra.mxu0 0.0
        %247 = vmatpush.msra.mxu0 0.0
        %248 = vmatpush.msra.mxu0 0.0
        %249 = vmatpush.msra.mxu0 0.0
        %250 = vmatpush.msra.mxu0 0.0
        %251 = vmatpush.msra.mxu0 0.0
        %252 = vmatpush.msra.mxu0 0.0
        %253 = vmatpush.msra.mxu0 0.0
        %254 = vmatpush.msra.mxu0 0.0
        %255 = vmatpush.msra.mxu0 0.0
        %256 = vmatpush.msra.mxu0 %v236
        %257 = vmatpush.msra.mxu0 %v232
        %258 = vmatpush.msra.mxu0 %v228
        %259 = vmatpush.msra.mxu0 %v224
        %260 = vmatmul.f32.gmra.mxu0 %v242
        %v261 = vpop.f32.mrf.mxu0
        %v262 = vadd.f32 0.0, %v261
        %263 = vdwg.mxu0
        %264 = vmatpush.msra.mxu0 0.0
        %265 = vmatpush.msra.mxu0 0.0
        %266 = vmatpush.msra.mxu0 0.0
        %267 = vmatpush.msra.mxu0 0.0
        %268 = vmatpush.msra.mxu0 0.0
        %269 = vmatpush.msra.mxu0 0.0
        %270 = vmatpush.msra.mxu0 0.0
        %271 = vmatpush.msra.mxu0 0.0
        %272 = vmatpush.msra.mxu0 0.0
        %273 = vmatpush.msra.mxu0 0.0
        %274 = vmatpush.msra.mxu0 0.0
        %275 = vmatpush.msra.mxu0 0.0
        %276 = vmatpush.msra.mxu0 %v237
        %277 = vmatpush.msra.mxu0 %v233
        %278 = vmatpush.msra.mxu0 %v229
        %279 = vmatpush.msra.mxu0 %v225
        %280 = vmatmul.f32.gmra.mxu0 %v242
        %v281 = vpop.f32.mrf.mxu0
        %v282 = vadd.f32 0.0, %v281
        %283 = vdwg.mxu0
        %284 = vmatpush.msra.mxu0 0.0
        %285 = vmatpush.msra.mxu0 0.0
        %286 = vmatpush.msra.mxu0 0.0
        %287 = vmatpush.msra.mxu0 0.0
        %288 = vmatpush.msra.mxu0 0.0
        %289 = vmatpush.msra.mxu0 0.0
        %290 = vmatpush.msra.mxu0 0.0
        %291 = vmatpush.msra.mxu0 0.0
        %292 = vmatpush.msra.mxu0 0.0
        %293 = vmatpush.msra.mxu0 0.0
        %294 = vmatpush.msra.mxu0 0.0
        %295 = vmatpush.msra.mxu0 0.0
        %296 = vmatpush.msra.mxu0 %v238
        %297 = vmatpush.msra.mxu0 %v234
        %298 = vmatpush.msra.mxu0 %v230
        %299 = vmatpush.msra.mxu0 %v226
        %300 = vmatmul.f32.gmra.mxu0 %v242
        %v301 = vpop.f32.mrf.mxu0
        %v302 = vadd.f32 0.0, %v301
        %303 = vdwg.mxu0
        %304 = vmatpush.msra.mxu0 0.0
        %305 = vmatpush.msra.mxu0 0.0
        %306 = vmatpush.msra.mxu0 0.0
        %307 = vmatpush.msra.mxu0 0.0
        %308 = vmatpush.msra.mxu0 0.0
        %309 = vmatpush.msra.mxu0 0.0
        %310 = vmatpush.msra.mxu0 0.0
        %311 = vmatpush.msra.mxu0 0.0
        %312 = vmatpush.msra.mxu0 0.0
        %313 = vmatpush.msra.mxu0 0.0
        %314 = vmatpush.msra.mxu0 0.0
        %315 = vmatpush.msra.mxu0 0.0
        %316 = vmatpush.msra.mxu0 %v239
        %317 = vmatpush.msra.mxu0 %v235
        %318 = vmatpush.msra.mxu0 %v231
        %319 = vmatpush.msra.mxu0 %v227
        %320 = vmatmul.f32.gmra.mxu0 %v242
        %v321 = vpop.f32.mrf.mxu0
        %v322 = vadd.f32 0.0, %v321
        %323 = vdwg.mxu0
        %v324 = vadd.f32 %v262, %v282
        %v325 = vadd.f32 %v324, %v302
        %v326 = vadd.f32 %v325, %v322
        %327 = vadd.xlane.f32.xlu0 %v326
        %v328 = vpop.xlane.xlu0 %327
        %v329 = vmul.f32 %v328, 0.001953125
        %v330 = vsub.f32 %v262, %v329
        %v331 = vsub.f32 %v282, %v329
        %v332 = vsub.f32 %v302, %v329
        %v333 = vsub.f32 %v322, %v329
        %v334 = vmul.f32 %v330, %v330
        %v335 = vmul.f32 %v331, %v331
        %v336 = vmul.f32 %v332, %v332
        %v337 = vmul.f32 %v333, %v333
        %v338 = vadd.f32 %v334, %v335
        %v339 = vadd.f32 %v338, %v336
        %v340 = vadd.f32 %v339, %v337
        %341 = vadd.xlane.f32.xlu0 %v340
        %v342 = vpop.xlane.xlu0 %341
        %v343 = vmul.f32 %v342, 0.001953125
        %v344 = vadd.f32 %v343, 1e-05
        %v345 = vrsqrt.pop %v344
        %v346 = vmul.f32 %v345, %v344
        %v347 = vmul.f32 %v346, %v345
        %v348 = vmul.f32 0.5, %v347
        %v349 = vsub.f32 1.5, %v348
        %v350 = vmul.f32 %v345, %v349
        %vm351 = vweird.f32 %v344
        %vm352 = vweird.f32 %v345
        %vm353 = vmor %vm351, %vm352
        %v354 = vsel %vm353, %v345, %v350
        %v355 = vmul.f32 %v330, %v354
        %v356 = vmul.f32 %v331, %v354
        %v357 = vmul.f32 %v332, %v354
        %v358 = vmul.f32 %v333, %v354
        %v359 = vmax.f32 %v355, 0.0
        %v360 = vmax.f32 %v356, 0.0
        %v361 = vmax.f32 %v357, 0.0
        %v362 = vmax.f32 %v358, 0.0
        %vm363 = vcmask 64512
        %v365 = vsel %vm363, %v219, 0
        %367 = vmatpush.msra.mxu0 0.0
        %368 = vmatpush.msra.mxu0 0.0
        %369 = vmatpush.msra.mxu0 0.0
        %370 = vmatpush.msra.mxu0 0.0
        %371 = vmatpush.msra.mxu0 0.0
        %372 = vmatpush.msra.mxu0 0.0
        %373 = vmatpush.msra.mxu0 0.0
        %374 = vmatpush.msra.mxu0 0.0
        %375 = vmatpush.msra.mxu0 0.0
        %376 = vmatpush.msra.mxu0 0.0
        %377 = vmatpush.msra.mxu0 0.0
        %378 = vmatpush.msra.mxu0 0.0
        %379 = vmatpush.msra.mxu0 0.0
        %380 = vmatpush.msra.mxu0 0.0
        %381 = vmatpush.msra.mxu0 0.0
        %382 = vmatpush.msra.mxu0 %v359
        %383 = vmatmul.f32.gmra.mxu0 %v365
        %v384 = vpop.f32.mrf.mxu0
        %v385 = vadd.f32 0.0, %v384
        %386 = vdwg.mxu0
        %387 = vmatpush.msra.mxu0 0.0
        %388 = vmatpush.msra.mxu0 0.0
        %389 = vmatpush.msra.mxu0 0.0
        %390 = vmatpush.msra.mxu0 0.0
        %391 = vmatpush.msra.mxu0 0.0
        %392 = vmatpush.msra.mxu0 0.0
        %393 = vmatpush.msra.mxu0 0.0
        %394 = vmatpush.msra.mxu0 0.0
        %395 = vmatpush.msra.mxu0 0.0
        %396 = vmatpush.msra.mxu0 0.0
        %397 = vmatpush.msra.mxu0 0.0
        %398 = vmatpush.msra.mxu0 0.0
        %399 = vmatpush.msra.mxu0 0.0
        %400 = vmatpush.msra.mxu0 0.0
        %401 = vmatpush.msra.mxu0 0.0
        %402 = vmatpush.msra.mxu0 %v360
        %403 = vmatmul.f32.gmra.mxu0 %v365
        %v404 = vpop.f32.mrf.mxu0
        %v405 = vadd.f32 0.0, %v404
        %406 = vdwg.mxu0
        %407 = vmatpush.msra.mxu0 0.0
        %408 = vmatpush.msra.mxu0 0.0
        %409 = vmatpush.msra.mxu0 0.0
        %410 = vmatpush.msra.mxu0 0.0
        %411 = vmatpush.msra.mxu0 0.0
        %412 = vmatpush.msra.mxu0 0.0
        %413 = vmatpush.msra.mxu0 0.0
        %414 = vmatpush.msra.mxu0 0.0
        %415 = vmatpush.msra.mxu0 0.0
        %416 = vmatpush.msra.mxu0 0.0
        %417 = vmatpush.msra.mxu0 0.0
        %418 = vmatpush.msra.mxu0 0.0
        %419 = vmatpush.msra.mxu0 0.0
        %420 = vmatpush.msra.mxu0 0.0
        %421 = vmatpush.msra.mxu0 0.0
        %422 = vmatpush.msra.mxu0 %v361
        %423 = vmatmul.f32.gmra.mxu0 %v365
        %v424 = vpop.f32.mrf.mxu0
        %v425 = vadd.f32 0.0, %v424
        %426 = vdwg.mxu0
        %427 = vmatpush.msra.mxu0 0.0
        %428 = vmatpush.msra.mxu0 0.0
        %429 = vmatpush.msra.mxu0 0.0
        %430 = vmatpush.msra.mxu0 0.0
        %431 = vmatpush.msra.mxu0 0.0
        %432 = vmatpush.msra.mxu0 0.0
        %433 = vmatpush.msra.mxu0 0.0
        %434 = vmatpush.msra.mxu0 0.0
        %435 = vmatpush.msra.mxu0 0.0
        %436 = vmatpush.msra.mxu0 0.0
        %437 = vmatpush.msra.mxu0 0.0
        %438 = vmatpush.msra.mxu0 0.0
        %439 = vmatpush.msra.mxu0 0.0
        %440 = vmatpush.msra.mxu0 0.0
        %441 = vmatpush.msra.mxu0 0.0
        %442 = vmatpush.msra.mxu0 %v362
        %443 = vmatmul.f32.gmra.mxu0 %v365
        %v444 = vpop.f32.mrf.mxu0
        %v445 = vadd.f32 0.0, %v444
        %446 = vdwg.mxu0
        %v447 = vadd.f32 %v385, %v405
        %v448 = vadd.f32 %v447, %v425
        %v449 = vadd.f32 %v448, %v445
        %450 = vadd.xlane.f32.xlu0 %v449
        %v451 = vpop.xlane.xlu0 %450
        %v452 = vmul.f32 %v451, 0.001953125
        %v453 = vsub.f32 %v385, %v452
        %v454 = vsub.f32 %v405, %v452
        %v455 = vsub.f32 %v425, %v452
        %v456 = vsub.f32 %v445, %v452
        %v457 = vmul.f32 %v453, %v453
        %v458 = vmul.f32 %v454, %v454
        %v459 = vmul.f32 %v455, %v455
        %v460 = vmul.f32 %v456, %v456
        %v461 = vadd.f32 %v457, %v458
        %v462 = vadd.f32 %v461, %v459
        %v463 = vadd.f32 %v462, %v460
        %464 = vadd.xlane.f32.xlu0 %v463
        %v465 = vpop.xlane.xlu0 %464
        %v466 = vmul.f32 %v465, 0.001953125
        %v467 = vadd.f32 %v466, 1e-05
        %v468 = vrsqrt.pop %v467
        %v469 = vmul.f32 %v468, %v467
        %v470 = vmul.f32 %v469, %v468
        %v471 = vmul.f32 0.5, %v470
        %v472 = vsub.f32 1.5, %v471
        %v473 = vmul.f32 %v468, %v472
        %vm474 = vweird.f32 %v467
        %vm475 = vweird.f32 %v468
        %vm476 = vmor %vm474, %vm475
        %v477 = vsel %vm476, %v468, %v473
        %v478 = vmul.f32 %v453, %v477
        %v479 = vmul.f32 %v454, %v477
        %v480 = vmul.f32 %v455, %v477
        %v481 = vmul.f32 %v456, %v477
        %v482 = vmax.f32 %v478, 0.0
        %v483 = vmax.f32 %v479, 0.0
        %v484 = vmax.f32 %v480, 0.0
        %v485 = vmax.f32 %v481, 0.0
        %v487 = vsel %vm363, %v220, 0
        %v490 = vsel %vm363, %v221, 0
        %v493 = vsel %vm363, %v222, 0
        %v496 = vsel %vm363, %v223, 0
        %498 = vmatpush.msra.mxu0 0.0
        %499 = vmatpush.msra.mxu0 0.0
        %500 = vmatpush.msra.mxu0 0.0
        %501 = vmatpush.msra.mxu0 0.0
        %502 = vmatpush.msra.mxu0 0.0
        %503 = vmatpush.msra.mxu0 0.0
        %504 = vmatpush.msra.mxu0 0.0
        %505 = vmatpush.msra.mxu0 0.0
        %506 = vmatpush.msra.mxu0 0.0
        %507 = vmatpush.msra.mxu0 0.0
        %508 = vmatpush.msra.mxu0 0.0
        %509 = vmatpush.msra.mxu0 0.0
        %510 = vmatpush.msra.mxu0 0.0
        %511 = vmatpush.msra.mxu0 0.0
        %512 = vmatpush.msra.mxu0 0.0
        %513 = vmatpush.msra.mxu0 %v482
        %514 = vmatmul.f32.gmra.mxu0 %v487
        %v515 = vpop.f32.mrf.mxu0
        %v516 = vadd.f32 0.0, %v515
        %517 = vmatmul.f32.gmra.mxu0 %v490
        %v518 = vpop.f32.mrf.mxu0
        %v519 = vadd.f32 0.0, %v518
        %520 = vmatmul.f32.gmra.mxu0 %v493
        %v521 = vpop.f32.mrf.mxu0
        %v522 = vadd.f32 0.0, %v521
        %523 = vmatmul.f32.gmra.mxu0 %v496
        %v524 = vpop.f32.mrf.mxu0
        %v525 = vadd.f32 0.0, %v524
        %526 = vdwg.mxu0
        %527 = vmatpush.msra.mxu0 0.0
        %528 = vmatpush.msra.mxu0 0.0
        %529 = vmatpush.msra.mxu0 0.0
        %530 = vmatpush.msra.mxu0 0.0
        %531 = vmatpush.msra.mxu0 0.0
        %532 = vmatpush.msra.mxu0 0.0
        %533 = vmatpush.msra.mxu0 0.0
        %534 = vmatpush.msra.mxu0 0.0
        %535 = vmatpush.msra.mxu0 0.0
        %536 = vmatpush.msra.mxu0 0.0
        %537 = vmatpush.msra.mxu0 0.0
        %538 = vmatpush.msra.mxu0 0.0
        %539 = vmatpush.msra.mxu0 0.0
        %540 = vmatpush.msra.mxu0 0.0
        %541 = vmatpush.msra.mxu0 0.0
        %542 = vmatpush.msra.mxu0 %v483
        %543 = vmatmul.f32.gmra.mxu0 %v487
        %v544 = vpop.f32.mrf.mxu0
        %v545 = vadd.f32 0.0, %v544
        %546 = vmatmul.f32.gmra.mxu0 %v490
        %v547 = vpop.f32.mrf.mxu0
        %v548 = vadd.f32 0.0, %v547
        %549 = vmatmul.f32.gmra.mxu0 %v493
        %v550 = vpop.f32.mrf.mxu0
        %v551 = vadd.f32 0.0, %v550
        %552 = vmatmul.f32.gmra.mxu0 %v496
        %v553 = vpop.f32.mrf.mxu0
        %v554 = vadd.f32 0.0, %v553
        %555 = vdwg.mxu0
        %556 = vmatpush.msra.mxu0 0.0
        %557 = vmatpush.msra.mxu0 0.0
        %558 = vmatpush.msra.mxu0 0.0
        %559 = vmatpush.msra.mxu0 0.0
        %560 = vmatpush.msra.mxu0 0.0
        %561 = vmatpush.msra.mxu0 0.0
        %562 = vmatpush.msra.mxu0 0.0
        %563 = vmatpush.msra.mxu0 0.0
        %564 = vmatpush.msra.mxu0 0.0
        %565 = vmatpush.msra.mxu0 0.0
        %566 = vmatpush.msra.mxu0 0.0
        %567 = vmatpush.msra.mxu0 0.0
        %568 = vmatpush.msra.mxu0 0.0
        %569 = vmatpush.msra.mxu0 0.0
        %570 = vmatpush.msra.mxu0 0.0
        %571 = vmatpush.msra.mxu0 %v484
        %572 = vmatmul.f32.gmra.mxu0 %v487
        %v573 = vpop.f32.mrf.mxu0
        %v574 = vadd.f32 0.0, %v573
        %575 = vmatmul.f32.gmra.mxu0 %v490
        %v576 = vpop.f32.mrf.mxu0
        %v577 = vadd.f32 0.0, %v576
        %578 = vmatmul.f32.gmra.mxu0 %v493
        %v579 = vpop.f32.mrf.mxu0
        %v580 = vadd.f32 0.0, %v579
        %581 = vmatmul.f32.gmra.mxu0 %v496
        %v582 = vpop.f32.mrf.mxu0
        %v583 = vadd.f32 0.0, %v582
        %584 = vdwg.mxu0
        %585 = vmatpush.msra.mxu0 0.0
        %586 = vmatpush.msra.mxu0 0.0
        %587 = vmatpush.msra.mxu0 0.0
        %588 = vmatpush.msra.mxu0 0.0
        %589 = vmatpush.msra.mxu0 0.0
        %590 = vmatpush.msra.mxu0 0.0
        %591 = vmatpush.msra.mxu0 0.0
        %592 = vmatpush.msra.mxu0 0.0
        %593 = vmatpush.msra.mxu0 0.0
        %594 = vmatpush.msra.mxu0 0.0
        %595 = vmatpush.msra.mxu0 0.0
        %596 = vmatpush.msra.mxu0 0.0
        %597 = vmatpush.msra.mxu0 0.0
        %598 = vmatpush.msra.mxu0 0.0
        %599 = vmatpush.msra.mxu0 0.0
        %600 = vmatpush.msra.mxu0 %v485
        %601 = vmatmul.f32.gmra.mxu0 %v487
        %v602 = vpop.f32.mrf.mxu0
        %v603 = vadd.f32 0.0, %v602
        %604 = vmatmul.f32.gmra.mxu0 %v490
        %v605 = vpop.f32.mrf.mxu0
        %v606 = vadd.f32 0.0, %v605
        %607 = vmatmul.f32.gmra.mxu0 %v493
        %v608 = vpop.f32.mrf.mxu0
        %v609 = vadd.f32 0.0, %v608
        %610 = vmatmul.f32.gmra.mxu0 %v496
        %v611 = vpop.f32.mrf.mxu0
        %v612 = vadd.f32 0.0, %v611
        %613 = vdwg.mxu0
        %v614 = vadd.f32 %v516, %v545
        %v615 = vadd.f32 %v614, %v574
        %v616 = vadd.f32 %v615, %v603
        %617 = vadd.xlane.f32.xlu0 %v616
        %v618 = vpop.xlane.xlu0 %617
        %v619 = vadd.f32 %v519, %v548
        %v620 = vadd.f32 %v619, %v577
        %v621 = vadd.f32 %v620, %v606
        %622 = vadd.xlane.f32.xlu0 %v621
        %v623 = vpop.xlane.xlu0 %622
        %v624 = vadd.f32 %v522, %v551
        %v625 = vadd.f32 %v624, %v580
        %v626 = vadd.f32 %v625, %v609
        %627 = vadd.xlane.f32.xlu0 %v626
        %v628 = vpop.xlane.xlu0 %627
        %v629 = vadd.f32 %v525, %v554
        %v630 = vadd.f32 %v629, %v583
        %v631 = vadd.f32 %v630, %v612
        %632 = vadd.xlane.f32.xlu0 %v631
        %v633 = vpop.xlane.xlu0 %632
        %v634 = vmul.f32 %v618, 0.001953125
        %v635 = vmul.f32 %v623, 0.001953125
        %v636 = vmul.f32 %v628, 0.001953125
        %v637 = vmul.f32 %v633, 0.001953125
        %v638 = vsub.f32 %v516, %v634
        %v639 = vsub.f32 %v545, %v634
        %v640 = vsub.f32 %v574, %v634
        %v641 = vsub.f32 %v603, %v634
        %v642 = vsub.f32 %v519, %v635
        %v643 = vsub.f32 %v548, %v635
        %v644 = vsub.f32 %v577, %v635
        %v645 = vsub.f32 %v606, %v635
        %v646 = vsub.f32 %v522, %v636
        %v647 = vsub.f32 %v551, %v636
        %v648 = vsub.f32 %v580, %v636
        %v649 = vsub.f32 %v609, %v636
        %v650 = vsub.f32 %v525, %v637
        %v651 = vsub.f32 %v554, %v637
        %v652 = vsub.f32 %v583, %v637
        %v653 = vsub.f32 %v612, %v637
        %v654 = vmul.f32 %v638, %v638
        %v655 = vmul.f32 %v639, %v639
        %v656 = vmul.f32 %v640, %v640
        %v657 = vmul.f32 %v641, %v641
        %v658 = vmul.f32 %v642, %v642
        %v659 = vmul.f32 %v643, %v643
        %v660 = vmul.f32 %v644, %v644
        %v661 = vmul.f32 %v645, %v645
        %v662 = vmul.f32 %v646, %v646
        %v663 = vmul.f32 %v647, %v647
        %v664 = vmul.f32 %v648, %v648
        %v665 = vmul.f32 %v649, %v649
        %v666 = vmul.f32 %v650, %v650
        %v667 = vmul.f32 %v651, %v651
        %v668 = vmul.f32 %v652, %v652
        %v669 = vmul.f32 %v653, %v653
        %v670 = vadd.f32 %v654, %v655
        %v671 = vadd.f32 %v670, %v656
        %v672 = vadd.f32 %v671, %v657
        %673 = vadd.xlane.f32.xlu0 %v672
        %v674 = vpop.xlane.xlu0 %673
        %v675 = vadd.f32 %v658, %v659
        %v676 = vadd.f32 %v675, %v660
        %v677 = vadd.f32 %v676, %v661
        %678 = vadd.xlane.f32.xlu0 %v677
        %v679 = vpop.xlane.xlu0 %678
        %v680 = vadd.f32 %v662, %v663
        %v681 = vadd.f32 %v680, %v664
        %v682 = vadd.f32 %v681, %v665
        %683 = vadd.xlane.f32.xlu0 %v682
        %v684 = vpop.xlane.xlu0 %683
        %v685 = vadd.f32 %v666, %v667
        %v686 = vadd.f32 %v685, %v668
        %v687 = vadd.f32 %v686, %v669
        %688 = vadd.xlane.f32.xlu0 %v687
        %v689 = vpop.xlane.xlu0 %688
        %v690 = vmul.f32 %v674, 0.001953125
        %v691 = vmul.f32 %v679, 0.001953125
        %v692 = vmul.f32 %v684, 0.001953125
        %v693 = vmul.f32 %v689, 0.001953125
        %v694 = vadd.f32 %v690, 1e-05
        %v695 = vadd.f32 %v691, 1e-05
        %v696 = vadd.f32 %v692, 1e-05
        %v697 = vadd.f32 %v693, 1e-05
        %v698 = vrsqrt.pop %v694
        %v699 = vmul.f32 %v698, %v694
        %v700 = vmul.f32 %v699, %v698
        %v701 = vmul.f32 0.5, %v700
        %v702 = vsub.f32 1.5, %v701
        %v703 = vmul.f32 %v698, %v702
        %vm704 = vweird.f32 %v694
        %vm705 = vweird.f32 %v698
        %vm706 = vmor %vm704, %vm705
        %v707 = vsel %vm706, %v698, %v703
        %v708 = vrsqrt.pop %v695
        %v709 = vmul.f32 %v708, %v695
        %v710 = vmul.f32 %v709, %v708
        %v711 = vmul.f32 0.5, %v710
        %v712 = vsub.f32 1.5, %v711
        %v713 = vmul.f32 %v708, %v712
        %vm714 = vweird.f32 %v695
        %vm715 = vweird.f32 %v708
        %vm716 = vmor %vm714, %vm715
        %v717 = vsel %vm716, %v708, %v713
        %v718 = vrsqrt.pop %v696
        %v719 = vmul.f32 %v718, %v696
        %v720 = vmul.f32 %v719, %v718
        %v721 = vmul.f32 0.5, %v720
        %v722 = vsub.f32 1.5, %v721
        %v723 = vmul.f32 %v718, %v722
        %vm724 = vweird.f32 %v696
        %vm725 = vweird.f32 %v718
        %vm726 = vmor %vm724, %vm725
        %v727 = vsel %vm726, %v718, %v723
        %v728 = vrsqrt.pop %v697
        %v729 = vmul.f32 %v728, %v697
        %v730 = vmul.f32 %v729, %v728
        %v731 = vmul.f32 0.5, %v730
        %v732 = vsub.f32 1.5, %v731
        %v733 = vmul.f32 %v728, %v732
        %vm734 = vweird.f32 %v697
        %vm735 = vweird.f32 %v728
        %vm736 = vmor %vm734, %vm735
        %v737 = vsel %vm736, %v728, %v733
        %v738 = vmul.f32 %v638, %v707
        %v739 = vmul.f32 %v639, %v707
        %v740 = vmul.f32 %v640, %v707
        %v741 = vmul.f32 %v641, %v707
        %v742 = vmul.f32 %v642, %v717
        %v743 = vmul.f32 %v643, %v717
        %v744 = vmul.f32 %v644, %v717
        %v745 = vmul.f32 %v645, %v717
        %v746 = vmul.f32 %v646, %v727
        %v747 = vmul.f32 %v647, %v727
        %v748 = vmul.f32 %v648, %v727
        %v749 = vmul.f32 %v649, %v727
        %v750 = vmul.f32 %v650, %v737
        %v751 = vmul.f32 %v651, %v737
        %v752 = vmul.f32 %v652, %v737
        %v753 = vmul.f32 %v653, %v737
        %v754 = vadd.f32 %v738, %v224
        %v755 = vadd.f32 %v739, %v225
        %v756 = vadd.f32 %v740, %v226
        %v757 = vadd.f32 %v741, %v227
        %v758 = vadd.f32 %v742, %v228
        %v759 = vadd.f32 %v743, %v229
        %v760 = vadd.f32 %v744, %v230
        %v761 = vadd.f32 %v745, %v231
        %v762 = vadd.f32 %v746, %v232
        %v763 = vadd.f32 %v747, %v233
        %v764 = vadd.f32 %v748, %v234
        %v765 = vadd.f32 %v749, %v235
        %v766 = vadd.f32 %v750, %v236
        %v767 = vadd.f32 %v751, %v237
        %v768 = vadd.f32 %v752, %v238
        %v769 = vadd.f32 %v753, %v239
        %v770 = vmax.f32 %v754, 0.0
        %v771 = vmax.f32 %v755, 0.0
        %v772 = vmax.f32 %v756, 0.0
        %v773 = vmax.f32 %v757, 0.0
        %v774 = vmax.f32 %v758, 0.0
        %v775 = vmax.f32 %v759, 0.0
        %v776 = vmax.f32 %v760, 0.0
        %v777 = vmax.f32 %v761, 0.0
        %v778 = vmax.f32 %v762, 0.0
        %v779 = vmax.f32 %v763, 0.0
        %v780 = vmax.f32 %v764, 0.0
        %v781 = vmax.f32 %v765, 0.0
        %v782 = vmax.f32 %v766, 0.0
        %v783 = vmax.f32 %v767, 0.0
        %v784 = vmax.f32 %v768, 0.0
        %v785 = vmax.f32 %v769, 0.0
        %786 = vst [vmem:[%s217] sm:$0xff] %v770
        %787 = vst [vmem:[%s217 + $0x8] sm:$0xff] %v771
        %788 = vst [vmem:[%s217 + $0x10] sm:$0xff] %v772
        %789 = vst [vmem:[%s217 + $0x18] sm:$0xff] %v773
        %790 = vst [vmem:[%s217 + $0x20] sm:$0xff] %v774
        %791 = vst [vmem:[%s217 + $0x28] sm:$0xff] %v775
        %792 = vst [vmem:[%s217 + $0x30] sm:$0xff] %v776
        %793 = vst [vmem:[%s217 + $0x38] sm:$0xff] %v777
        %794 = vst [vmem:[%s217 + $0x40] sm:$0xff] %v778
        %795 = vst [vmem:[%s217 + $0x48] sm:$0xff] %v779
        %796 = vst [vmem:[%s217 + $0x50] sm:$0xff] %v780
        %797 = vst [vmem:[%s217 + $0x58] sm:$0xff] %v781
        %798 = vst [vmem:[%s217 + $0x60] sm:$0xff] %v782
        %799 = vst [vmem:[%s217 + $0x68] sm:$0xff] %v783
        %800 = vst [vmem:[%s217 + $0x70] sm:$0xff] %v784
        %801 = vst [vmem:[%s217 + $0x78] sm:$0xff] %v785
        %s802 = sand.u32 %s118, 1
        %s803 = scalar_lea.sflag [#allocation4], %s802
        %s804 = sand.u32 %s118, 1
        %s805 = smul.addr %s804, 128
        %s806 = scalar_lea.vmem [#allocation5], %s805
        // Predicated region
        $region41: #{tpu_custom_call.1} parent=35 // pred_check
          %p807 = pneg %p128
        $region42: #{tpu_custom_call.1} parent=35 // pred_check_branch
          %809 = sbr.rel (%p807) target = $region44
        $region43: #{tpu_custom_call.1} parent=35 // pred_region
          %811 = vsyncadd %s803, 0
          %s812 = smul.addr %s21, 16
          %s813 = smul.addr %s812, 8
          %s814 = scalar_lea.hbm %s4, %s813
          %s815 = sshll.u32 %s806, 4
          %s816 = int_to_ptr.vmem [resolvable:$true] %s815
          %s817 = sshll.u32 %s814, 4
          %s818 = int_to_ptr.hbm [resolvable:$true] %s817
          %823 = dma.vmem_to_hbm [thread:$0]  %s816, 2048, %s818, %s803, 512, 512, 32
        $region44: #{tpu_custom_call.1} parent=35 // pred_fallthru
          _
      $region36: #{tpu_custom_call.1} parent=5 // pred_fallthru
        _
      %p824 = scmp.le.s32.totalorder 2, %s16
      // Predicated region
      $region45: #{tpu_custom_call.1} parent=5 // pred_check
        %p825 = pneg %p824
      $region46: #{tpu_custom_call.1} parent=5 // pred_check_branch
        %827 = sbr.rel (%p825) target = $region48
      $region47: #{tpu_custom_call.1} parent=5 // pred_region
        %s828 = ssub.s32 %s16, 2
        // Predicated region
        $region49: #{tpu_custom_call.1} parent=47 // pred_check
          %p829 = pneg %p134
        $region50: #{tpu_custom_call.1} parent=47 // pred_check_branch
          %831 = sbr.rel (%p829) target = $region52
        $region51: #{tpu_custom_call.1} parent=47 // pred_region
          %s832 = sand.u32 %s119, 1
          %s833 = scalar_lea.sflag [#allocation4], %s832
          %s834 = sand.u32 %s119, 1
          %s835 = smul.addr %s834, 128
          %s836 = scalar_lea.vmem [#allocation5], %s835
          %838 = dma.done %s833, 2048
        $region52: #{tpu_custom_call.1} parent=47 // pred_fallthru
          _
      $region48: #{tpu_custom_call.1} parent=5 // pred_fallthru
        _
    $region6: #{tpu_custom_call.1} parent=1 // loop_footer
      %s20 = sadd.s32 1, %s16
    $region7: #{tpu_custom_call.1} parent=1 // loop_footer_branch
      %15 = sbr.rel target = $region3
    $region8: #{tpu_custom_call.1} parent=1 // loop_exit
      _
    %839 = vsyncpa [#allocation3], 1
    %s840 = scalar_lea.sflag [#allocation3], 1
    %841 = vsyncpa %s840, 1
    %842 = vsyncpa [#allocation4], 1
    %s843 = scalar_lea.sflag [#allocation4], 1
    %844 = vsyncpa %s843, 1

</llo_original>
